<compile_context>
chip_gen: v7x
topology: tpu7x:2x2x1
jax: 0.10.0
libtpu: 0.0.40
codegen_flags: <defaults>
</compile_context>

<pallas_src>
import jax
import jax.numpy as jnp
from jax.experimental import pallas as pl
from jax.experimental.pallas import tpu as pltpu

HIDDEN = 128


def _sigmoid_via_tanh(x):
    # sigmoid(x) == 0.5 * (tanh(x/2) + 1): single EUP transcendental per element.
    return 0.5 * (jnp.tanh(0.5 * x) + 1.0)


def _recurrent_gcn_kernel(x_ref, w_ref, b_ref, wl_ref, bl_ref, out_ref):
    """One node-tile of the simplified single-step DCRNN + Linear + Sigmoid.

    x_ref  : (F, tile_n)    node features, feature-major (nodes on lanes)
    w_ref  : (256, F)       fused X-side gate weights [Wz_x ; Wh_x]
    b_ref  : (256, 1)       fused gate biases [bz ; bh] (broadcast over lanes)
    wl_ref : (1, 128)       Linear(128, 1) weight row
    bl_ref : (1, 1) SMEM    Linear bias (scalar)
    out_ref: (1, tile_n)    lane-dense per-node output row
    """
    # Single fused MXU pass for both live gates: (256, F) @ (F, tile_n).
    g = jnp.dot(w_ref[...], x_ref[...], preferred_element_type=jnp.float32) + b_ref[...]
    z = _sigmoid_via_tanh(g[:HIDDEN, :])          # sublane slice at the 128 boundary
    h_tilde = jnp.tanh(g[HIDDEN:, :])
    # H0 == 0  =>  H = (1 - Z) * H~ ; then F.relu.
    h_relu = jnp.maximum((1.0 - z) * h_tilde, 0.0)
    # Linear(128 -> 1) + Sigmoid: (1,128) @ (128, tile_n) -> lane-dense (1, tile_n),
    # no transpose needed in the feature-major layout.
    row = jnp.dot(wl_ref[...], h_relu, preferred_element_type=jnp.float32) + bl_ref[0, 0]
    out_ref[...] = _sigmoid_via_tanh(row)


def _round_up(n, m):
    return ((n + m - 1) // m) * m


def _num_tensorcores():
    # v7x has 2 TensorCores per chip; everything else we target here has 1.
    try:
        kind = (getattr(jax.devices()[0], "device_kind", "") or "").lower()
        return 2 if "v7" in kind else 1
    except Exception:
        return 1


def recurrent_gcn_forward(x, edge_index, edge_weight, fused_params, *, num_node_tiles=None):
    # K=1 DCRNN skips graph diffusion entirely; edges kept for signature fidelity.
    del edge_index, edge_weight
    w_fused, b_fused, wl_row, bl = fused_params
    N, F = x.shape

    if num_node_tiles is None:
        num_node_tiles = _num_tensorcores()

    # Feature-major: nodes on the lane axis (dense DMA / dense stores, no in-kernel
    # transpose). The wrapper-side transpose of a (N, F=4) array is free plumbing.
    x_fm = x.T  # (F, N)

    # Biggest tile that keeps the grid at exactly `num_node_tiles` steps
    # (1 for single-TC chips, 2 for v7x megacore). VMEM is a non-issue at these
    # shapes, so tiles get bigger, not smaller. Lane dim kept a multiple of 128.
    tile_n = _round_up(pl.cdiv(N, num_node_tiles), 128)
    n_pad = tile_n * num_node_tiles
    if n_pad != N:
        x_fm = jnp.pad(x_fm, ((0, 0), (0, n_pad - N)))
    grid = (n_pad // tile_n,)

    out_row = pl.pallas_call(
        _recurrent_gcn_kernel,
        grid=grid,
        in_specs=[
            pl.BlockSpec((F, tile_n), lambda i: (0, i)),          # x: node-lane-dense tiles
            pl.BlockSpec((2 * HIDDEN, F), lambda i: (0, 0)),      # fused gate weights
            pl.BlockSpec((2 * HIDDEN, 1), lambda i: (0, 0)),      # fused gate biases
            pl.BlockSpec((1, HIDDEN), lambda i: (0, 0)),          # linear weight row
            pl.BlockSpec(memory_space=pltpu.MemorySpace.SMEM),    # linear bias scalar
        ],
        out_specs=pl.BlockSpec((1, tile_n), lambda i: (0, i)),
        out_shape=jax.ShapeDtypeStruct((1, n_pad), jnp.float32),
        compiler_params=pltpu.CompilerParams(
            dimension_semantics=("parallel",)),
    )(x_fm, w_fused, b_fused, wl_row, bl)

    return out_row[0, :N].reshape(N, 1)


def init_params(key, node_features):
    """Parameters with the original module's shapes (pre-combined for K=1)."""
    f_in = node_features + HIDDEN
    keys = jax.random.split(key, 5)

    def glorot(k, shape):
        fan_in, fan_out = shape[-2], shape[-1]
        lim = (6.0 / (fan_in + fan_out)) ** 0.5
        return jax.random.uniform(k, shape, jnp.float32, -lim, lim)

    def dconv(k):
        w = glorot(k, (2, 1, f_in, HIDDEN))      # DConv weight (2, K=1, F+H, H)
        w_comb = w[0, 0] + w[1, 0]               # K=1 forward uses W[0,0] + W[1,0]
        return (w_comb[:node_features],          # X-part   (F, 128)
                w_comb[node_features:],          # H-part   (128, 128)
                jnp.zeros((1, HIDDEN), jnp.float32))  # DConv bias init = zeros

    wzx, wzh, bz = dconv(keys[0])
    wrx, wrh, br = dconv(keys[1])
    whx, whh, bh = dconv(keys[2])

    lim = 1.0 / (HIDDEN ** 0.5)                  # torch Linear default init
    wl = jax.random.uniform(keys[3], (HIDDEN, 1), jnp.float32, -lim, lim)
    bl = jax.random.uniform(keys[4], (1, 1), jnp.float32, -lim, lim)
    return dict(wzx=wzx, wzh=wzh, bz=bz, wrx=wrx, wrh=wrh, br=br,
                whx=whx, whh=whh, bh=bh, wl=wl, bl=bl)


def fuse_params(params):
    """Kernel-side params: only the algebraically live pieces, fused, feature-major."""
    w_fused = jnp.concatenate([params["wzx"], params["whx"]], axis=1).T  # (256, F)
    b_fused = jnp.concatenate([params["bz"], params["bh"]], axis=1).T    # (256, 1)
    wl_row = params["wl"].T                                              # (1, 128)
    bl = params["bl"]                                                    # (1, 1)
    return w_fused, b_fused, wl_row, bl


def reference_forward(x, params):
    """Pure-JAX reference of the FULL original math (H0, R gate, Z*H0 term)."""
    h = jnp.zeros((x.shape[0], HIDDEN), jnp.float32)
    z = jax.nn.sigmoid(x @ params["wzx"] + h @ params["wzh"] + params["bz"])
    r = jax.nn.sigmoid(x @ params["wrx"] + h @ params["wrh"] + params["br"])
    ht = jnp.tanh(x @ params["whx"] + (h * r) @ params["whh"] + params["bh"])
    hn = z * h + (1.0 - z) * ht
    hn = jnp.maximum(hn, 0.0)
    return jax.nn.sigmoid(hn @ params["wl"] + params["bl"])


if __name__ == "__main__":
    key = jax.random.PRNGKey(0)
    kx, kp = jax.random.split(key)

    N, F = 1024, 4                                # 1024 graph nodes, 4 node features
    x = jax.random.normal(kx, (N, F), jnp.float32)

    # Ring graph (unused by the math for K=1, but part of the signature).
    src = jnp.arange(N, dtype=jnp.int32)
    dst = (src + 1) % N
    edge_index = jnp.stack([src, dst])            # (2, N)
    edge_weight = jnp.ones((N,), jnp.float32)     # (N,)

    params = init_params(kp, F)
    fused = fuse_params(params)

    out = recurrent_gcn_forward(x, edge_index, edge_weight, fused)
    out = jax.block_until_ready(out)

    ref = reference_forward(x, params)            # full (un-simplified) math
    assert out.shape == (N, 1)
    assert bool(jnp.allclose(out, ref, atol=1e-5, rtol=1e-5))
    print("KERNEL_OK")
</pallas_src>

<mosaic_0001>
module attributes {stable_mosaic.version = 11 : i64} {
  func.func @_recurrent_gcn_kernel(%arg0: i32, %arg1: memref<4x1024xf32, #tpu.memory_space<vmem>>, %arg2: memref<256x4xf32, #tpu.memory_space<vmem>>, %arg3: memref<256x1xf32, #tpu.memory_space<vmem>>, %arg4: memref<1x128xf32, #tpu.memory_space<vmem>>, %arg5: memref<1x1xf32, #tpu.memory_space<smem>>, %arg6: memref<1x1024xf32, #tpu.memory_space<vmem>>) attributes {dimension_semantics = [#tpu.dimension_semantics<parallel>], iteration_bounds = array<i64: 1>, scalar_prefetch = 0 : i64, scratch_operands = 0 : i64, tpu.core_type = #tpu.core_type<tc>, window_params = [{transform_indices = @transform_0, window_bounds = array<i64: 4, 1024>}, {pipeline_mode = #tpu.pipeline_mode<synchronous>, transform_indices = @transform_1, window_bounds = array<i64: 256, 4>}, {pipeline_mode = #tpu.pipeline_mode<synchronous>, transform_indices = @transform_2, window_bounds = array<i64: 256, 1>}, {pipeline_mode = #tpu.pipeline_mode<synchronous>, transform_indices = @transform_3, window_bounds = array<i64: 1, 128>}, {transform_indices = @transform_4, window_bounds = array<i64: 1, 1>}, {transform_indices = @transform_5, window_bounds = array<i64: 1, 1024>}]} {
    %c0 = arith.constant 0 : index
    %c0_0 = arith.constant 0 : index
    %0 = vector.load %arg2[%c0, %c0_0] : memref<256x4xf32, #tpu.memory_space<vmem>>, vector<256x4xf32>
    %c0_1 = arith.constant 0 : index
    %c0_2 = arith.constant 0 : index
    %1 = vector.load %arg1[%c0_1, %c0_2] : memref<4x1024xf32, #tpu.memory_space<vmem>>, vector<4x1024xf32>
    %cst = arith.constant dense<0.000000e+00> : vector<256x1024xf32>
    %2 = tpu.matmul %0, %1, %cst {dimension_numbers = #tpu.dot_dimension_numbers<[1], [0], [0], [1], [0, 0, 1, 1], [], []>} : vector<256x4xf32>, vector<4x1024xf32>, vector<256x1024xf32> -> vector<256x1024xf32>
    %c0_3 = arith.constant 0 : index
    %c0_4 = arith.constant 0 : index
    %3 = vector.load %arg3[%c0_3, %c0_4] : memref<256x1xf32, #tpu.memory_space<vmem>>, vector<256x1xf32>
    %4 = vector.broadcast %3 : vector<256x1xf32> to vector<256x1024xf32>
    %5 = arith.addf %2, %4 : vector<256x1024xf32>
    %6 = vector.extract_strided_slice %5 {offsets = [0, 0], sizes = [128, 1024], strides = [1, 1]} : vector<256x1024xf32> to vector<128x1024xf32>
    %cst_5 = arith.constant 5.000000e-01 : f32
    %7 = vector.broadcast %cst_5 : f32 to vector<128x1024xf32>
    %8 = arith.mulf %7, %6 : vector<128x1024xf32>
    %9 = math.tanh %8 : vector<128x1024xf32>
    %cst_6 = arith.constant 1.000000e+00 : f32
    %10 = vector.broadcast %cst_6 : f32 to vector<128x1024xf32>
    %11 = arith.addf %9, %10 : vector<128x1024xf32>
    %cst_7 = arith.constant 5.000000e-01 : f32
    %12 = vector.broadcast %cst_7 : f32 to vector<128x1024xf32>
    %13 = arith.mulf %12, %11 : vector<128x1024xf32>
    %14 = vector.extract_strided_slice %5 {offsets = [128, 0], sizes = [128, 1024], strides = [1, 1]} : vector<256x1024xf32> to vector<128x1024xf32>
    %15 = math.tanh %14 : vector<128x1024xf32>
    %cst_8 = arith.constant 1.000000e+00 : f32
    %16 = vector.broadcast %cst_8 : f32 to vector<128x1024xf32>
    %17 = arith.subf %16, %13 : vector<128x1024xf32>
    %18 = arith.mulf %17, %15 : vector<128x1024xf32>
    %cst_9 = arith.constant 0.000000e+00 : f32
    %19 = vector.broadcast %cst_9 : f32 to vector<128x1024xf32>
    %20 = arith.maximumf %18, %19 : vector<128x1024xf32>
    %c0_10 = arith.constant 0 : index
    %c0_11 = arith.constant 0 : index
    %21 = vector.load %arg4[%c0_10, %c0_11] : memref<1x128xf32, #tpu.memory_space<vmem>>, vector<1x128xf32>
    %cst_12 = arith.constant dense<0.000000e+00> : vector<1x1024xf32>
    %22 = tpu.matmul %21, %20, %cst_12 {dimension_numbers = #tpu.dot_dimension_numbers<[1], [0], [0], [1], [0, 0, 1, 1], [], []>} : vector<1x128xf32>, vector<128x1024xf32>, vector<1x1024xf32> -> vector<1x1024xf32>
    %c0_13 = arith.constant 0 : index
    %c0_14 = arith.constant 0 : index
    %23 = memref.load %arg5[%c0_13, %c0_14] : memref<1x1xf32, #tpu.memory_space<smem>>
    %24 = vector.broadcast %23 : f32 to vector<1x1024xf32>
    %25 = arith.addf %22, %24 : vector<1x1024xf32>
    %cst_15 = arith.constant 5.000000e-01 : f32
    %26 = vector.broadcast %cst_15 : f32 to vector<1x1024xf32>
    %27 = arith.mulf %26, %25 : vector<1x1024xf32>
    %28 = math.tanh %27 : vector<1x1024xf32>
    %cst_16 = arith.constant 1.000000e+00 : f32
    %29 = vector.broadcast %cst_16 : f32 to vector<1x1024xf32>
    %30 = arith.addf %28, %29 : vector<1x1024xf32>
    %cst_17 = arith.constant 5.000000e-01 : f32
    %31 = vector.broadcast %cst_17 : f32 to vector<1x1024xf32>
    %32 = arith.mulf %31, %30 : vector<1x1024xf32>
    %c0_18 = arith.constant 0 : index
    %c0_19 = arith.constant 0 : index
    %33 = vector.load %arg6[%c0_18, %c0_19] : memref<1x1024xf32, #tpu.memory_space<vmem>>, vector<1x1024xf32>
    tpu.vector_store %arg6[%c0_18, %c0_19], %32 {strides = array<i32>} : memref<1x1024xf32, #tpu.memory_space<vmem>>, vector<1x1024xf32>,
    return
  }
  func.func @transform_0(%arg0: i32) -> (i32, i32) {
    %c0_i32 = arith.constant 0 : i32
    %c0_i32_0 = arith.constant 0 : i32
    return %c0_i32, %arg0 : i32, i32
  }
  func.func @transform_1(%arg0: i32) -> (i32, i32) {
    %c0_i32 = arith.constant 0 : i32
    %c0_i32_0 = arith.constant 0 : i32
    %c0_i32_1 = arith.constant 0 : i32
    return %c0_i32, %c0_i32_0 : i32, i32
  }
  func.func @transform_2(%arg0: i32) -> (i32, i32) {
    %c0_i32 = arith.constant 0 : i32
    %c0_i32_0 = arith.constant 0 : i32
    %c0_i32_1 = arith.constant 0 : i32
    return %c0_i32, %c0_i32_0 : i32, i32
  }
  func.func @transform_3(%arg0: i32) -> (i32, i32) {
    %c0_i32 = arith.constant 0 : i32
    %c0_i32_0 = arith.constant 0 : i32
    %c0_i32_1 = arith.constant 0 : i32
    return %c0_i32, %c0_i32_0 : i32, i32
  }
  func.func @transform_4(%arg0: i32) -> (i32, i32) {
    %c0_i32 = arith.constant 0 : i32
    %c0_i32_0 = arith.constant 0 : i32
    %c0_i32_1 = arith.constant 0 : i32
    return %c0_i32, %c0_i32_0 : i32, i32
  }
  func.func @transform_5(%arg0: i32) -> (i32, i32) {
    %c0_i32 = arith.constant 0 : i32
    %c0_i32_0 = arith.constant 0 : i32
    return %c0_i32, %arg0 : i32, i32
  }
}

</mosaic_0001>

<llo_original>
// kernel: tpu_custom_call.1
$region0: #{tpu_custom_call.1}
  #allocation0 [shape = 'u32[]', space=smem, size = 0x4, offset = 0x4, fixed_abs, tag = 'smem constant byte address 0x4 - core index']
  #allocation1 [shape = 'u32[144,128]{1,0:T(1,128)}', space=vmem, size = 0x12000, scoped, tag = 'internal scratch']
  #allocation2 [shape = 'f32[1,1]{1,0:T(1,128)S(6)}', space=smem, size = 0x200, scoped, tag = 'scoped memory for tpu_custom_call.1']
  %s0 = inlined_call_operand.vmem [shape: f32[4,1024], index: 0, kind: input, shape index: {}]
  %s1 = inlined_call_operand.vmem [shape: f32[256,4], index: 1, kind: input, shape index: {}]
  %s2 = inlined_call_operand.vmem [shape: f32[256,1], index: 2, kind: input, shape index: {}]
  %s3 = inlined_call_operand.vmem [shape: f32[1,128], index: 3, kind: input, shape index: {}]
  %s4 = inlined_call_operand.<no memory space> [shape: f32[1,1], index: 4, kind: input, shape index: {}]
  %s5 = inlined_call_operand.hbm [shape: f32[1,1024], index: 5, kind: output, shape index: {}]
  %s6 = sld [smem:[#allocation0]]
  $region30: #{tpu_custom_call.1} parent=0
    _
  %s8 = ssub.s32 1, %s6
  %s9 = scalar_select 0, %s8, %s6
  %10 = sst [smem:[#allocation2]] %s4
  $region1: #{tpu_custom_call.1} parent=0
    #allocation3 [shape = 'u8[4096]{0}', space=vmem, size = 0x1000, scoped, tag = 'output window, operand 0, single buffered']
    #allocation4 [shape = 's32[1]{0}', space=sflag, size = 0x4, scoped, tag = 'scoped memory for tpu_custom_call.1']
    %11 = vsyncpa [#allocation4], 0
    // Predicated region
    $region2: #{tpu_custom_call.1} parent=1 // pred_check
      _
    $region3: #{tpu_custom_call.1} parent=1 // pred_check_branch
      %13 = sbr.rel (0) target = $region5
    $region4: #{tpu_custom_call.1} parent=1 // pred_region
      _
    $region5: #{tpu_custom_call.1} parent=1 // pred_fallthru
      _
    // Predicated region
    $region6: #{tpu_custom_call.1} parent=1 // pred_check
      _
    $region7: #{tpu_custom_call.1} parent=1 // pred_check_branch
      %15 = sbr.rel (0) target = $region9
    $region8: #{tpu_custom_call.1} parent=1 // pred_region
      _
    $region9: #{tpu_custom_call.1} parent=1 // pred_fallthru
      _
    // Predicated region
    $region10: #{tpu_custom_call.1} parent=1 // pred_check
      _
    $region11: #{tpu_custom_call.1} parent=1 // pred_check_branch
      %17 = sbr.rel (0) target = $region13
    $region12: #{tpu_custom_call.1} parent=1 // pred_region
      _
    $region13: #{tpu_custom_call.1} parent=1 // pred_fallthru
      _
    // Predicated region
    $region14: #{tpu_custom_call.1} parent=1 // pred_check
      _
    $region15: #{tpu_custom_call.1} parent=1 // pred_check_branch
      %19 = sbr.rel (0) target = $region17
    $region16: #{tpu_custom_call.1} parent=1 // pred_region
      _
    $region17: #{tpu_custom_call.1} parent=1 // pred_fallthru
      _
    // Predicated region
    $region18: #{tpu_custom_call.1} parent=1 // pred_check
      _
    $region19: #{tpu_custom_call.1} parent=1 // pred_check_branch
      %21 = sbr.rel (0) target = $region21
    $region20: #{tpu_custom_call.1} parent=1 // pred_region
      _
    $region21: #{tpu_custom_call.1} parent=1 // pred_fallthru
      _
    %v22 = vld [vmem:[%s1] sm:$0xff]
    %v23 = vld [vmem:[%s1 + $0x8] sm:$0xff]
    %v24 = vld [vmem:[%s1 + $0x10] sm:$0xff]
    %v25 = vld [vmem:[%s1 + $0x18] sm:$0xff]
    %v26 = vld [vmem:[%s1 + $0x20] sm:$0xff]
    %v27 = vld [vmem:[%s1 + $0x28] sm:$0xff]
    %v28 = vld [vmem:[%s1 + $0x30] sm:$0xff]
    %v29 = vld [vmem:[%s1 + $0x38] sm:$0xff]
    %v30 = vld [vmem:[%s1 + $0x40] sm:$0xff]
    %v31 = vld [vmem:[%s1 + $0x48] sm:$0xff]
    %v32 = vld [vmem:[%s1 + $0x50] sm:$0xff]
    %v33 = vld [vmem:[%s1 + $0x58] sm:$0xff]
    %v34 = vld [vmem:[%s1 + $0x60] sm:$0xff]
    %v35 = vld [vmem:[%s1 + $0x68] sm:$0xff]
    %v36 = vld [vmem:[%s1 + $0x70] sm:$0xff]
    %v37 = vld [vmem:[%s1 + $0x78] sm:$0xff]
    %v38 = vld [vmem:[%s1 + $0x80] sm:$0xff]
    %v39 = vld [vmem:[%s1 + $0x88] sm:$0xff]
    %v40 = vld [vmem:[%s1 + $0x90] sm:$0xff]
    %v41 = vld [vmem:[%s1 + $0x98] sm:$0xff]
    %v42 = vld [vmem:[%s1 + $0xa0] sm:$0xff]
    %v43 = vld [vmem:[%s1 + $0xa8] sm:$0xff]
    %v44 = vld [vmem:[%s1 + $0xb0] sm:$0xff]
    %v45 = vld [vmem:[%s1 + $0xb8] sm:$0xff]
    %v46 = vld [vmem:[%s1 + $0xc0] sm:$0xff]
    %v47 = vld [vmem:[%s1 + $0xc8] sm:$0xff]
    %v48 = vld [vmem:[%s1 + $0xd0] sm:$0xff]
    %v49 = vld [vmem:[%s1 + $0xd8] sm:$0xff]
    %v50 = vld [vmem:[%s1 + $0xe0] sm:$0xff]
    %v51 = vld [vmem:[%s1 + $0xe8] sm:$0xff]
    %v52 = vld [vmem:[%s1 + $0xf0] sm:$0xff]
    %v53 = vld [vmem:[%s1 + $0xf8] sm:$0xff]
    %v54 = vld [vmem:[%s0] sm:$0xff]
    %v55 = vld [vmem:[%s0 + $0x8] sm:$0xff]
    %v56 = vld [vmem:[%s0 + $0x10] sm:$0xff]
    %v57 = vld [vmem:[%s0 + $0x18] sm:$0xff]
    %v58 = vld [vmem:[%s2] sm:$0xff]
    %v59 = vld [vmem:[%s2 + $0x8] sm:$0xff]
    %v60 = vld [vmem:[%s2 + $0x10] sm:$0xff]
    %v61 = vld [vmem:[%s2 + $0x18] sm:$0xff]
    %v62 = vld [vmem:[%s2 + $0x20] sm:$0xff]
    %v63 = vld [vmem:[%s2 + $0x28] sm:$0xff]
    %v64 = vld [vmem:[%s2 + $0x30] sm:$0xff]
    %v65 = vld [vmem:[%s2 + $0x38] sm:$0xff]
    %v66 = vld [vmem:[%s2 + $0x40] sm:$0xff]
    %v67 = vld [vmem:[%s2 + $0x48] sm:$0xff]
    %v68 = vld [vmem:[%s2 + $0x50] sm:$0xff]
    %v69 = vld [vmem:[%s2 + $0x58] sm:$0xff]
    %v70 = vld [vmem:[%s2 + $0x60] sm:$0xff]
    %v71 = vld [vmem:[%s2 + $0x68] sm:$0xff]
    %v72 = vld [vmem:[%s2 + $0x70] sm:$0xff]
    %v73 = vld [vmem:[%s2 + $0x78] sm:$0xff]
    %v74 = vld [vmem:[%s2 + $0x80] sm:$0xff]
    %v75 = vld [vmem:[%s2 + $0x88] sm:$0xff]
    %v76 = vld [vmem:[%s2 + $0x90] sm:$0xff]
    %v77 = vld [vmem:[%s2 + $0x98] sm:$0xff]
    %v78 = vld [vmem:[%s2 + $0xa0] sm:$0xff]
    %v79 = vld [vmem:[%s2 + $0xa8] sm:$0xff]
    %v80 = vld [vmem:[%s2 + $0xb0] sm:$0xff]
    %v81 = vld [vmem:[%s2 + $0xb8] sm:$0xff]
    %v82 = vld [vmem:[%s2 + $0xc0] sm:$0xff]
    %v83 = vld [vmem:[%s2 + $0xc8] sm:$0xff]
    %v84 = vld [vmem:[%s2 + $0xd0] sm:$0xff]
    %v85 = vld [vmem:[%s2 + $0xd8] sm:$0xff]
    %v86 = vld [vmem:[%s2 + $0xe0] sm:$0xff]
    %v87 = vld [vmem:[%s2 + $0xe8] sm:$0xff]
    %v88 = vld [vmem:[%s2 + $0xf0] sm:$0xff]
    %v89 = vld [vmem:[%s2 + $0xf8] sm:$0xff]
    %91 = vset.pattern.permute.xlu0 0
    %92 = vperm.xlu0 %91, %v58
    %v93 = vpop.permute.xlu0 %92
    %96 = vset.pattern.permute.xlu0 0
    %97 = vperm.xlu0 %96, %v59
    %v98 = vpop.permute.xlu0 %97
    %101 = vset.pattern.permute.xlu0 0
    %102 = vperm.xlu0 %101, %v60
    %v103 = vpop.permute.xlu0 %102
    %106 = vset.pattern.permute.xlu0 0
    %107 = vperm.xlu0 %106, %v61
    %v108 = vpop.permute.xlu0 %107
    %111 = vset.pattern.permute.xlu0 0
    %112 = vperm.xlu0 %111, %v62
    %v113 = vpop.permute.xlu0 %112
    %116 = vset.pattern.permute.xlu0 0
    %117 = vperm.xlu0 %116, %v63
    %v118 = vpop.permute.xlu0 %117
    %121 = vset.pattern.permute.xlu0 0
    %122 = vperm.xlu0 %121, %v64
    %v123 = vpop.permute.xlu0 %122
    %126 = vset.pattern.permute.xlu0 0
    %127 = vperm.xlu0 %126, %v65
    %v128 = vpop.permute.xlu0 %127
    %131 = vset.pattern.permute.xlu0 0
    %132 = vperm.xlu0 %131, %v66
    %v133 = vpop.permute.xlu0 %132
    %136 = vset.pattern.permute.xlu0 0
    %137 = vperm.xlu0 %136, %v67
    %v138 = vpop.permute.xlu0 %137
    %141 = vset.pattern.permute.xlu0 0
    %142 = vperm.xlu0 %141, %v68
    %v143 = vpop.permute.xlu0 %142
    %146 = vset.pattern.permute.xlu0 0
    %147 = vperm.xlu0 %146, %v69
    %v148 = vpop.permute.xlu0 %147
    %151 = vset.pattern.permute.xlu0 0
    %152 = vperm.xlu0 %151, %v70
    %v153 = vpop.permute.xlu0 %152
    %156 = vset.pattern.permute.xlu0 0
    %157 = vperm.xlu0 %156, %v71
    %v158 = vpop.permute.xlu0 %157
    %161 = vset.pattern.permute.xlu0 0
    %162 = vperm.xlu0 %161, %v72
    %v163 = vpop.permute.xlu0 %162
    %166 = vset.pattern.permute.xlu0 0
    %167 = vperm.xlu0 %166, %v73
    %v168 = vpop.permute.xlu0 %167
    %171 = vset.pattern.permute.xlu0 0
    %172 = vperm.xlu0 %171, %v74
    %v173 = vpop.permute.xlu0 %172
    %176 = vset.pattern.permute.xlu0 0
    %177 = vperm.xlu0 %176, %v75
    %v178 = vpop.permute.xlu0 %177
    %181 = vset.pattern.permute.xlu0 0
    %182 = vperm.xlu0 %181, %v76
    %v183 = vpop.permute.xlu0 %182
    %186 = vset.pattern.permute.xlu0 0
    %187 = vperm.xlu0 %186, %v77
    %v188 = vpop.permute.xlu0 %187
    %191 = vset.pattern.permute.xlu0 0
    %192 = vperm.xlu0 %191, %v78
    %v193 = vpop.permute.xlu0 %192
    %196 = vset.pattern.permute.xlu0 0
    %197 = vperm.xlu0 %196, %v79
    %v198 = vpop.permute.xlu0 %197
    %201 = vset.pattern.permute.xlu0 0
    %202 = vperm.xlu0 %201, %v80
    %v203 = vpop.permute.xlu0 %202
    %206 = vset.pattern.permute.xlu0 0
    %207 = vperm.xlu0 %206, %v81
    %v208 = vpop.permute.xlu0 %207
    %211 = vset.pattern.permute.xlu0 0
    %212 = vperm.xlu0 %211, %v82
    %v213 = vpop.permute.xlu0 %212
    %216 = vset.pattern.permute.xlu0 0
    %217 = vperm.xlu0 %216, %v83
    %v218 = vpop.permute.xlu0 %217
    %221 = vset.pattern.permute.xlu0 0
    %222 = vperm.xlu0 %221, %v84
    %v223 = vpop.permute.xlu0 %222
    %226 = vset.pattern.permute.xlu0 0
    %227 = vperm.xlu0 %226, %v85
    %v228 = vpop.permute.xlu0 %227
    %231 = vset.pattern.permute.xlu0 0
    %232 = vperm.xlu0 %231, %v86
    %v233 = vpop.permute.xlu0 %232
    %236 = vset.pattern.permute.xlu0 0
    %237 = vperm.xlu0 %236, %v87
    %v238 = vpop.permute.xlu0 %237
    %241 = vset.pattern.permute.xlu0 0
    %242 = vperm.xlu0 %241, %v88
    %v243 = vpop.permute.xlu0 %242
    %246 = vset.pattern.permute.xlu0 0
    %247 = vperm.xlu0 %246, %v89
    %v248 = vpop.permute.xlu0 %247
    %v254 = vcombine.high %v54, %v54
    %v255 = vcombine.high %v55, %v55
    %v256 = vcombine.high %v56, %v56
    %v257 = vcombine.high %v57, %v57
    %vm258 = vcmask 31744
    %v260 = vsel %vm258, %v22, 0
    %v263 = vsel %vm258, %v23, 0
    %v266 = vsel %vm258, %v24, 0
    %v269 = vsel %vm258, %v25, 0
    %v272 = vsel %vm258, %v26, 0
    %v275 = vsel %vm258, %v27, 0
    %v278 = vsel %vm258, %v28, 0
    %v281 = vsel %vm258, %v29, 0
    %v284 = vsel %vm258, %v30, 0
    %v287 = vsel %vm258, %v31, 0
    %v290 = vsel %vm258, %v32, 0
    %v293 = vsel %vm258, %v33, 0
    %v296 = vsel %vm258, %v34, 0
    %v299 = vsel %vm258, %v35, 0
    %v302 = vsel %vm258, %v36, 0
    %v305 = vsel %vm258, %v37, 0
    %v308 = vsel %vm258, %v38, 0
    %v311 = vsel %vm258, %v39, 0
    %v314 = vsel %vm258, %v40, 0
    %v317 = vsel %vm258, %v41, 0
    %v320 = vsel %vm258, %v42, 0
    %v323 = vsel %vm258, %v43, 0
    %v326 = vsel %vm258, %v44, 0
    %v329 = vsel %vm258, %v45, 0
    %v332 = vsel %vm258, %v46, 0
    %v335 = vsel %vm258, %v47, 0
    %v338 = vsel %vm258, %v48, 0
    %v341 = vsel %vm258, %v49, 0
    %v344 = vsel %vm258, %v50, 0
    %v347 = vsel %vm258, %v51, 0
    %v350 = vsel %vm258, %v52, 0
    %v353 = vsel %vm258, %v53, 0
    %vm355 = vcmask 1043456
    %v356 = vsel %vm355, %v54, 0
    %v358 = vsel %vm355, %v254, 0
    %v360 = vsel %vm355, %v55, 0
    %v362 = vsel %vm355, %v255, 0
    %v364 = vsel %vm355, %v56, 0
    %v366 = vsel %vm355, %v256, 0
    %v368 = vsel %vm355, %v57, 0
    %v370 = vsel %vm355, %v257, 0
    %372 = vmatprep.subr.mxu0 %v358
    %373 = vmatpush1.msra.mxu0 %v356
    %374 = vmatprep.subr.mxu0 0.0
    %375 = vmatpush1.msra.mxu0 0.0
    %376 = vmatprep.subr.mxu0 0.0
    %377 = vmatpush1.msra.mxu0 0.0
    %378 = vmatprep.subr.mxu0 0.0
    %379 = vmatpush1.msra.mxu0 0.0
    %380 = vmatprep.subr.mxu0 0.0
    %381 = vmatpush1.msra.mxu0 0.0
    %382 = vmatprep.subr.mxu0 0.0
    %383 = vmatpush1.msra.mxu0 0.0
    %384 = vmatprep.subr.mxu0 0.0
    %385 = vmatpush1.msra.mxu0 0.0
    %386 = vmatprep.subr.mxu0 0.0
    %387 = vmatpush1.msra.mxu0 0.0
    %388 = vmatprep.subr.mxu0 0.0
    %389 = vmatpush1.msra.mxu0 0.0
    %390 = vmatprep.subr.mxu0 0.0
    %391 = vmatpush1.msra.mxu0 0.0
    %392 = vmatprep.subr.mxu0 0.0
    %393 = vmatpush1.msra.mxu0 0.0
    %394 = vmatprep.subr.mxu0 0.0
    %395 = vmatpush1.msra.mxu0 0.0
    %396 = vmatprep.subr.mxu0 0.0
    %397 = vmatpush1.msra.mxu0 0.0
    %398 = vmatprep.subr.mxu0 0.0
    %399 = vmatpush1.msra.mxu0 0.0
    %400 = vmatprep.subr.mxu0 0.0
    %401 = vmatpush1.msra.mxu0 0.0
    %402 = vmatprep.subr.mxu0 0.0
    %403 = vmatpush1.msra.mxu0 0.0
    %404 = vmatprep.subr.mxu0 0.0
    %405 = vmatpush1.msra.mxu0 0.0
    %406 = vmatprep.subr.mxu0 0.0
    %407 = vmatpush1.msra.mxu0 0.0
    %408 = vmatprep.subr.mxu0 0.0
    %409 = vmatpush1.msra.mxu0 0.0
    %410 = vmatprep.subr.mxu0 0.0
    %411 = vmatpush1.msra.mxu0 0.0
    %412 = vmatprep.subr.mxu0 0.0
    %413 = vmatpush1.msra.mxu0 0.0
    %414 = vmatprep.subr.mxu0 0.0
    %415 = vmatpush1.msra.mxu0 0.0
    %416 = vmatprep.subr.mxu0 0.0
    %417 = vmatpush1.msra.mxu0 0.0
    %418 = vmatprep.subr.mxu0 0.0
    %419 = vmatpush1.msra.mxu0 0.0
    %420 = vmatprep.subr.mxu0 0.0
    %421 = vmatpush1.msra.mxu0 0.0
    %422 = vmatprep.subr.mxu0 0.0
    %423 = vmatpush1.msra.mxu0 0.0
    %424 = vmatprep.subr.mxu0 0.0
    %425 = vmatpush1.msra.mxu0 0.0
    %426 = vmatprep.subr.mxu0 0.0
    %427 = vmatpush1.msra.mxu0 0.0
    %428 = vmatprep.subr.mxu0 0.0
    %429 = vmatpush1.msra.mxu0 0.0
    %430 = vmatprep.subr.mxu0 0.0
    %431 = vmatpush1.msra.mxu0 0.0
    %432 = vmatprep.subr.mxu0 0.0
    %433 = vmatpush1.msra.mxu0 0.0
    %434 = vmatprep.subr.mxu0 0.0
    %435 = vmatpush1.msra.mxu0 0.0
    %436 = vmatprep.mubr.f32.mxu0 0.0
    %437 = vmatmul.mubr.f32.gmra.mrb[0].mxu0 %v260
    %v438 = vpop.f32.mrb[0].mxu0
    %v439 = vadd.f32 %v93, %v438
    %v440 = vpop.f32.mrb[0].mxu0
    %v441 = vadd.f32 %v93, %v440
    %442 = vmatprep.mubr.f32.mxu0 0.0
    %443 = vmatmul.mubr.f32.gmra.mrb[0].mxu0 %v263
    %v444 = vpop.f32.mrb[0].mxu0
    %v445 = vadd.f32 %v98, %v444
    %v446 = vpop.f32.mrb[0].mxu0
    %v447 = vadd.f32 %v98, %v446
    %448 = vmatprep.mubr.f32.mxu0 0.0
    %449 = vmatmul.mubr.f32.gmra.mrb[0].mxu0 %v266
    %v450 = vpop.f32.mrb[0].mxu0
    %v451 = vadd.f32 %v103, %v450
    %v452 = vpop.f32.mrb[0].mxu0
    %v453 = vadd.f32 %v103, %v452
    %454 = vmatprep.mubr.f32.mxu0 0.0
    %455 = vmatmul.mubr.f32.gmra.mrb[0].mxu0 %v269
    %v456 = vpop.f32.mrb[0].mxu0
    %v457 = vadd.f32 %v108, %v456
    %v458 = vpop.f32.mrb[0].mxu0
    %v459 = vadd.f32 %v108, %v458
    %460 = vmatprep.mubr.f32.mxu0 0.0
    %461 = vmatmul.mubr.f32.gmra.mrb[0].mxu0 %v272
    %v462 = vpop.f32.mrb[0].mxu0
    %v463 = vadd.f32 %v113, %v462
    %v464 = vpop.f32.mrb[0].mxu0
    %v465 = vadd.f32 %v113, %v464
    %466 = vmatprep.mubr.f32.mxu0 0.0
    %467 = vmatmul.mubr.f32.gmra.mrb[0].mxu0 %v275
    %v468 = vpop.f32.mrb[0].mxu0
    %v469 = vadd.f32 %v118, %v468
    %v470 = vpop.f32.mrb[0].mxu0
    %v471 = vadd.f32 %v118, %v470
    %472 = vmatprep.mubr.f32.mxu0 0.0
    %473 = vmatmul.mubr.f32.gmra.mrb[0].mxu0 %v278
    %v474 = vpop.f32.mrb[0].mxu0
    %v475 = vadd.f32 %v123, %v474
    %v476 = vpop.f32.mrb[0].mxu0
    %v477 = vadd.f32 %v123, %v476
    %478 = vmatprep.mubr.f32.mxu0 0.0
    %479 = vmatmul.mubr.f32.gmra.mrb[0].mxu0 %v281
    %v480 = vpop.f32.mrb[0].mxu0
    %v481 = vadd.f32 %v128, %v480
    %v482 = vpop.f32.mrb[0].mxu0
    %v483 = vadd.f32 %v128, %v482
    %484 = vmatprep.mubr.f32.mxu0 0.0
    %485 = vmatmul.mubr.f32.gmra.mrb[0].mxu0 %v284
    %v486 = vpop.f32.mrb[0].mxu0
    %v487 = vadd.f32 %v133, %v486
    %v488 = vpop.f32.mrb[0].mxu0
    %v489 = vadd.f32 %v133, %v488
    %490 = vmatprep.mubr.f32.mxu0 0.0
    %491 = vmatmul.mubr.f32.gmra.mrb[0].mxu0 %v287
    %v492 = vpop.f32.mrb[0].mxu0
    %v493 = vadd.f32 %v138, %v492
    %v494 = vpop.f32.mrb[0].mxu0
    %v495 = vadd.f32 %v138, %v494
    %496 = vmatprep.mubr.f32.mxu0 0.0
    %497 = vmatmul.mubr.f32.gmra.mrb[0].mxu0 %v290
    %v498 = vpop.f32.mrb[0].mxu0
    %v499 = vadd.f32 %v143, %v498
    %v500 = vpop.f32.mrb[0].mxu0
    %v501 = vadd.f32 %v143, %v500
    %502 = vmatprep.mubr.f32.mxu0 0.0
    %503 = vmatmul.mubr.f32.gmra.mrb[0].mxu0 %v293
    %v504 = vpop.f32.mrb[0].mxu0
    %v505 = vadd.f32 %v148, %v504
    %v506 = vpop.f32.mrb[0].mxu0
    %v507 = vadd.f32 %v148, %v506
    %508 = vmatprep.mubr.f32.mxu0 0.0
    %509 = vmatmul.mubr.f32.gmra.mrb[0].mxu0 %v296
    %v510 = vpop.f32.mrb[0].mxu0
    %v511 = vadd.f32 %v153, %v510
    %v512 = vpop.f32.mrb[0].mxu0
    %v513 = vadd.f32 %v153, %v512
    %514 = vmatprep.mubr.f32.mxu0 0.0
    %515 = vmatmul.mubr.f32.gmra.mrb[0].mxu0 %v299
    %v516 = vpop.f32.mrb[0].mxu0
    %v517 = vadd.f32 %v158, %v516
    %v518 = vpop.f32.mrb[0].mxu0
    %v519 = vadd.f32 %v158, %v518
    %520 = vmatprep.mubr.f32.mxu0 0.0
    %521 = vmatmul.mubr.f32.gmra.mrb[0].mxu0 %v302
    %v522 = vpop.f32.mrb[0].mxu0
    %v523 = vadd.f32 %v163, %v522
    %v524 = vpop.f32.mrb[0].mxu0
    %v525 = vadd.f32 %v163, %v524
    %526 = vmatprep.mubr.f32.mxu0 0.0
    %527 = vmatmul.mubr.f32.gmra.mrb[0].mxu0 %v305
    %v528 = vpop.f32.mrb[0].mxu0
    %v529 = vadd.f32 %v168, %v528
    %v530 = vpop.f32.mrb[0].mxu0
    %v531 = vadd.f32 %v168, %v530
    %532 = vmatprep.mubr.f32.mxu0 0.0
    %533 = vmatmul.mubr.f32.gmra.mrb[0].mxu0 %v308
    %v534 = vpop.f32.mrb[0].mxu0
    %v535 = vadd.f32 %v173, %v534
    %v536 = vpop.f32.mrb[0].mxu0
    %v537 = vadd.f32 %v173, %v536
    %538 = vmatprep.mubr.f32.mxu0 0.0
    %539 = vmatmul.mubr.f32.gmra.mrb[0].mxu0 %v311
    %v540 = vpop.f32.mrb[0].mxu0
    %v541 = vadd.f32 %v178, %v540
    %v542 = vpop.f32.mrb[0].mxu0
    %v543 = vadd.f32 %v178, %v542
    %544 = vmatprep.mubr.f32.mxu0 0.0
    %545 = vmatmul.mubr.f32.gmra.mrb[0].mxu0 %v314
    %v546 = vpop.f32.mrb[0].mxu0
    %v547 = vadd.f32 %v183, %v546
    %v548 = vpop.f32.mrb[0].mxu0
    %v549 = vadd.f32 %v183, %v548
    %550 = vmatprep.mubr.f32.mxu0 0.0
    %551 = vmatmul.mubr.f32.gmra.mrb[0].mxu0 %v317
    %v552 = vpop.f32.mrb[0].mxu0
    %v553 = vadd.f32 %v188, %v552
    %v554 = vpop.f32.mrb[0].mxu0
    %v555 = vadd.f32 %v188, %v554
    %556 = vmatprep.mubr.f32.mxu0 0.0
    %557 = vmatmul.mubr.f32.gmra.mrb[0].mxu0 %v320
    %v558 = vpop.f32.mrb[0].mxu0
    %v559 = vadd.f32 %v193, %v558
    %v560 = vpop.f32.mrb[0].mxu0
    %v561 = vadd.f32 %v193, %v560
    %562 = vmatprep.mubr.f32.mxu0 0.0
    %563 = vmatmul.mubr.f32.gmra.mrb[0].mxu0 %v323
    %v564 = vpop.f32.mrb[0].mxu0
    %v565 = vadd.f32 %v198, %v564
    %v566 = vpop.f32.mrb[0].mxu0
    %v567 = vadd.f32 %v198, %v566
    %568 = vmatprep.mubr.f32.mxu0 0.0
    %569 = vmatmul.mubr.f32.gmra.mrb[0].mxu0 %v326
    %v570 = vpop.f32.mrb[0].mxu0
    %v571 = vadd.f32 %v203, %v570
    %v572 = vpop.f32.mrb[0].mxu0
    %v573 = vadd.f32 %v203, %v572
    %574 = vmatprep.mubr.f32.mxu0 0.0
    %575 = vmatmul.mubr.f32.gmra.mrb[0].mxu0 %v329
    %v576 = vpop.f32.mrb[0].mxu0
    %v577 = vadd.f32 %v208, %v576
    %v578 = vpop.f32.mrb[0].mxu0
    %v579 = vadd.f32 %v208, %v578
    %580 = vmatprep.mubr.f32.mxu0 0.0
    %581 = vmatmul.mubr.f32.gmra.mrb[0].mxu0 %v332
    %v582 = vpop.f32.mrb[0].mxu0
    %v583 = vadd.f32 %v213, %v582
    %v584 = vpop.f32.mrb[0].mxu0
    %v585 = vadd.f32 %v213, %v584
    %586 = vmatprep.mubr.f32.mxu0 0.0
    %587 = vmatmul.mubr.f32.gmra.mrb[0].mxu0 %v335
    %v588 = vpop.f32.mrb[0].mxu0
    %v589 = vadd.f32 %v218, %v588
    %v590 = vpop.f32.mrb[0].mxu0
    %v591 = vadd.f32 %v218, %v590
    %592 = vmatprep.mubr.f32.mxu0 0.0
    %593 = vmatmul.mubr.f32.gmra.mrb[0].mxu0 %v338
    %v594 = vpop.f32.mrb[0].mxu0
    %v595 = vadd.f32 %v223, %v594
    %v596 = vpop.f32.mrb[0].mxu0
    %v597 = vadd.f32 %v223, %v596
    %598 = vmatprep.mubr.f32.mxu0 0.0
    %599 = vmatmul.mubr.f32.gmra.mrb[0].mxu0 %v341
    %v600 = vpop.f32.mrb[0].mxu0
    %v601 = vadd.f32 %v228, %v600
    %v602 = vpop.f32.mrb[0].mxu0
    %v603 = vadd.f32 %v228, %v602
    %604 = vmatprep.mubr.f32.mxu0 0.0
    %605 = vmatmul.mubr.f32.gmra.mrb[0].mxu0 %v344
    %v606 = vpop.f32.mrb[0].mxu0
    %v607 = vadd.f32 %v233, %v606
    %v608 = vpop.f32.mrb[0].mxu0
    %v609 = vadd.f32 %v233, %v608
    %610 = vmatprep.mubr.f32.mxu0 0.0
    %611 = vmatmul.mubr.f32.gmra.mrb[0].mxu0 %v347
    %v612 = vpop.f32.mrb[0].mxu0
    %v613 = vadd.f32 %v238, %v612
    %v614 = vpop.f32.mrb[0].mxu0
    %v615 = vadd.f32 %v238, %v614
    %616 = vmatprep.mubr.f32.mxu0 0.0
    %617 = vmatmul.mubr.f32.gmra.mrb[0].mxu0 %v350
    %v618 = vpop.f32.mrb[0].mxu0
    %v619 = vadd.f32 %v243, %v618
    %v620 = vpop.f32.mrb[0].mxu0
    %v621 = vadd.f32 %v243, %v620
    %622 = vmatprep.mubr.f32.mxu0 0.0
    %623 = vmatmul.mubr.f32.gmra.mrb[0].mxu0 %v353
    %v624 = vpop.f32.mrb[0].mxu0
    %v625 = vadd.f32 %v248, %v624
    %v626 = vpop.f32.mrb[0].mxu0
    %v627 = vadd.f32 %v248, %v626
    %628 = vdwg.mxu0
    %629 = vmatprep.subr.mxu0 %v362
    %630 = vmatpush1.msra.mxu0 %v360
    %631 = vmatprep.subr.mxu0 0.0
    %632 = vmatpush1.msra.mxu0 0.0
    %633 = vmatprep.subr.mxu0 0.0
    %634 = vmatpush1.msra.mxu0 0.0
    %635 = vmatprep.subr.mxu0 0.0
    %636 = vmatpush1.msra.mxu0 0.0
    %637 = vmatprep.subr.mxu0 0.0
    %638 = vmatpush1.msra.mxu0 0.0
    %639 = vmatprep.subr.mxu0 0.0
    %640 = vmatpush1.msra.mxu0 0.0
    %641 = vmatprep.subr.mxu0 0.0
    %642 = vmatpush1.msra.mxu0 0.0
    %643 = vmatprep.subr.mxu0 0.0
    %644 = vmatpush1.msra.mxu0 0.0
    %645 = vmatprep.subr.mxu0 0.0
    %646 = vmatpush1.msra.mxu0 0.0
    %647 = vmatprep.subr.mxu0 0.0
    %648 = vmatpush1.msra.mxu0 0.0
    %649 = vmatprep.subr.mxu0 0.0
    %650 = vmatpush1.msra.mxu0 0.0
    %651 = vmatprep.subr.mxu0 0.0
    %652 = vmatpush1.msra.mxu0 0.0
    %653 = vmatprep.subr.mxu0 0.0
    %654 = vmatpush1.msra.mxu0 0.0
    %655 = vmatprep.subr.mxu0 0.0
    %656 = vmatpush1.msra.mxu0 0.0
    %657 = vmatprep.subr.mxu0 0.0
    %658 = vmatpush1.msra.mxu0 0.0
    %659 = vmatprep.subr.mxu0 0.0
    %660 = vmatpush1.msra.mxu0 0.0
    %661 = vmatprep.subr.mxu0 0.0
    %662 = vmatpush1.msra.mxu0 0.0
    %663 = vmatprep.subr.mxu0 0.0
    %664 = vmatpush1.msra.mxu0 0.0
    %665 = vmatprep.subr.mxu0 0.0
    %666 = vmatpush1.msra.mxu0 0.0
    %667 = vmatprep.subr.mxu0 0.0
    %668 = vmatpush1.msra.mxu0 0.0
    %669 = vmatprep.subr.mxu0 0.0
    %670 = vmatpush1.msra.mxu0 0.0
    %671 = vmatprep.subr.mxu0 0.0
    %672 = vmatpush1.msra.mxu0 0.0
    %673 = vmatprep.subr.mxu0 0.0
    %674 = vmatpush1.msra.mxu0 0.0
    %675 = vmatprep.subr.mxu0 0.0
    %676 = vmatpush1.msra.mxu0 0.0
    %677 = vmatprep.subr.mxu0 0.0
    %678 = vmatpush1.msra.mxu0 0.0
    %679 = vmatprep.subr.mxu0 0.0
    %680 = vmatpush1.msra.mxu0 0.0
    %681 = vmatprep.subr.mxu0 0.0
    %682 = vmatpush1.msra.mxu0 0.0
    %683 = vmatprep.subr.mxu0 0.0
    %684 = vmatpush1.msra.mxu0 0.0
    %685 = vmatprep.subr.mxu0 0.0
    %686 = vmatpush1.msra.mxu0 0.0
    %687 = vmatprep.subr.mxu0 0.0
    %688 = vmatpush1.msra.mxu0 0.0
    %689 = vmatprep.subr.mxu0 0.0
    %690 = vmatpush1.msra.mxu0 0.0
    %691 = vmatprep.subr.mxu0 0.0
    %692 = vmatpush1.msra.mxu0 0.0
    %693 = vmatprep.mubr.f32.mxu0 0.0
    %694 = vmatmul.mubr.f32.gmra.mrb[0].mxu0 %v260
    %v695 = vpop.f32.mrb[0].mxu0
    %v696 = vadd.f32 %v93, %v695
    %v697 = vpop.f32.mrb[0].mxu0
    %v698 = vadd.f32 %v93, %v697
    %699 = vmatprep.mubr.f32.mxu0 0.0
    %700 = vmatmul.mubr.f32.gmra.mrb[0].mxu0 %v263
    %v701 = vpop.f32.mrb[0].mxu0
    %v702 = vadd.f32 %v98, %v701
    %v703 = vpop.f32.mrb[0].mxu0
    %v704 = vadd.f32 %v98, %v703
    %705 = vmatprep.mubr.f32.mxu0 0.0
    %706 = vmatmul.mubr.f32.gmra.mrb[0].mxu0 %v266
    %v707 = vpop.f32.mrb[0].mxu0
    %v708 = vadd.f32 %v103, %v707
    %v709 = vpop.f32.mrb[0].mxu0
    %v710 = vadd.f32 %v103, %v709
    %711 = vmatprep.mubr.f32.mxu0 0.0
    %712 = vmatmul.mubr.f32.gmra.mrb[0].mxu0 %v269
    %v713 = vpop.f32.mrb[0].mxu0
    %v714 = vadd.f32 %v108, %v713
    %v715 = vpop.f32.mrb[0].mxu0
    %v716 = vadd.f32 %v108, %v715
    %717 = vmatprep.mubr.f32.mxu0 0.0
    %718 = vmatmul.mubr.f32.gmra.mrb[0].mxu0 %v272
    %v719 = vpop.f32.mrb[0].mxu0
    %v720 = vadd.f32 %v113, %v719
    %v721 = vpop.f32.mrb[0].mxu0
    %v722 = vadd.f32 %v113, %v721
    %723 = vmatprep.mubr.f32.mxu0 0.0
    %724 = vmatmul.mubr.f32.gmra.mrb[0].mxu0 %v275
    %v725 = vpop.f32.mrb[0].mxu0
    %v726 = vadd.f32 %v118, %v725
    %v727 = vpop.f32.mrb[0].mxu0
    %v728 = vadd.f32 %v118, %v727
    %729 = vmatprep.mubr.f32.mxu0 0.0
    %730 = vmatmul.mubr.f32.gmra.mrb[0].mxu0 %v278
    %v731 = vpop.f32.mrb[0].mxu0
    %v732 = vadd.f32 %v123, %v731
    %v733 = vpop.f32.mrb[0].mxu0
    %v734 = vadd.f32 %v123, %v733
    %735 = vmatprep.mubr.f32.mxu0 0.0
    %736 = vmatmul.mubr.f32.gmra.mrb[0].mxu0 %v281
    %v737 = vpop.f32.mrb[0].mxu0
    %v738 = vadd.f32 %v128, %v737
    %v739 = vpop.f32.mrb[0].mxu0
    %v740 = vadd.f32 %v128, %v739
    %741 = vmatprep.mubr.f32.mxu0 0.0
    %742 = vmatmul.mubr.f32.gmra.mrb[0].mxu0 %v284
    %v743 = vpop.f32.mrb[0].mxu0
    %v744 = vadd.f32 %v133, %v743
    %v745 = vpop.f32.mrb[0].mxu0
    %v746 = vadd.f32 %v133, %v745
    %747 = vmatprep.mubr.f32.mxu0 0.0
    %748 = vmatmul.mubr.f32.gmra.mrb[0].mxu0 %v287
    %v749 = vpop.f32.mrb[0].mxu0
    %v750 = vadd.f32 %v138, %v749
    %v751 = vpop.f32.mrb[0].mxu0
    %v752 = vadd.f32 %v138, %v751
    %753 = vmatprep.mubr.f32.mxu0 0.0
    %754 = vmatmul.mubr.f32.gmra.mrb[0].mxu0 %v290
    %v755 = vpop.f32.mrb[0].mxu0
    %v756 = vadd.f32 %v143, %v755
    %v757 = vpop.f32.mrb[0].mxu0
    %v758 = vadd.f32 %v143, %v757
    %759 = vmatprep.mubr.f32.mxu0 0.0
    %760 = vmatmul.mubr.f32.gmra.mrb[0].mxu0 %v293
    %v761 = vpop.f32.mrb[0].mxu0
    %v762 = vadd.f32 %v148, %v761
    %v763 = vpop.f32.mrb[0].mxu0
    %v764 = vadd.f32 %v148, %v763
    %765 = vmatprep.mubr.f32.mxu0 0.0
    %766 = vmatmul.mubr.f32.gmra.mrb[0].mxu0 %v296
    %v767 = vpop.f32.mrb[0].mxu0
    %v768 = vadd.f32 %v153, %v767
    %v769 = vpop.f32.mrb[0].mxu0
    %v770 = vadd.f32 %v153, %v769
    %771 = vmatprep.mubr.f32.mxu0 0.0
    %772 = vmatmul.mubr.f32.gmra.mrb[0].mxu0 %v299
    %v773 = vpop.f32.mrb[0].mxu0
    %v774 = vadd.f32 %v158, %v773
    %v775 = vpop.f32.mrb[0].mxu0
    %v776 = vadd.f32 %v158, %v775
    %777 = vmatprep.mubr.f32.mxu0 0.0
    %778 = vmatmul.mubr.f32.gmra.mrb[0].mxu0 %v302
    %v779 = vpop.f32.mrb[0].mxu0
    %v780 = vadd.f32 %v163, %v779
    %v781 = vpop.f32.mrb[0].mxu0
    %v782 = vadd.f32 %v163, %v781
    %783 = vmatprep.mubr.f32.mxu0 0.0
    %784 = vmatmul.mubr.f32.gmra.mrb[0].mxu0 %v305
    %v785 = vpop.f32.mrb[0].mxu0
    %v786 = vadd.f32 %v168, %v785
    %v787 = vpop.f32.mrb[0].mxu0
    %v788 = vadd.f32 %v168, %v787
    %789 = vmatprep.mubr.f32.mxu0 0.0
    %790 = vmatmul.mubr.f32.gmra.mrb[0].mxu0 %v308
    %v791 = vpop.f32.mrb[0].mxu0
    %v792 = vadd.f32 %v173, %v791
    %v793 = vpop.f32.mrb[0].mxu0
    %v794 = vadd.f32 %v173, %v793
    %795 = vmatprep.mubr.f32.mxu0 0.0
    %796 = vmatmul.mubr.f32.gmra.mrb[0].mxu0 %v311
    %v797 = vpop.f32.mrb[0].mxu0
    %v798 = vadd.f32 %v178, %v797
    %v799 = vpop.f32.mrb[0].mxu0
    %v800 = vadd.f32 %v178, %v799
    %801 = vmatprep.mubr.f32.mxu0 0.0
    %802 = vmatmul.mubr.f32.gmra.mrb[0].mxu0 %v314
    %v803 = vpop.f32.mrb[0].mxu0
    %v804 = vadd.f32 %v183, %v803
    %v805 = vpop.f32.mrb[0].mxu0
    %v806 = vadd.f32 %v183, %v805
    %807 = vmatprep.mubr.f32.mxu0 0.0
    %808 = vmatmul.mubr.f32.gmra.mrb[0].mxu0 %v317
    %v809 = vpop.f32.mrb[0].mxu0
    %v810 = vadd.f32 %v188, %v809
    %v811 = vpop.f32.mrb[0].mxu0
    %v812 = vadd.f32 %v188, %v811
    %813 = vmatprep.mubr.f32.mxu0 0.0
    %814 = vmatmul.mubr.f32.gmra.mrb[0].mxu0 %v320
    %v815 = vpop.f32.mrb[0].mxu0
    %v816 = vadd.f32 %v193, %v815
    %v817 = vpop.f32.mrb[0].mxu0
    %v818 = vadd.f32 %v193, %v817
    %819 = vmatprep.mubr.f32.mxu0 0.0
    %820 = vmatmul.mubr.f32.gmra.mrb[0].mxu0 %v323
    %v821 = vpop.f32.mrb[0].mxu0
    %v822 = vadd.f32 %v198, %v821
    %v823 = vpop.f32.mrb[0].mxu0
    %v824 = vadd.f32 %v198, %v823
    %825 = vmatprep.mubr.f32.mxu0 0.0
    %826 = vmatmul.mubr.f32.gmra.mrb[0].mxu0 %v326
    %v827 = vpop.f32.mrb[0].mxu0
    %v828 = vadd.f32 %v203, %v827
    %v829 = vpop.f32.mrb[0].mxu0
    %v830 = vadd.f32 %v203, %v829
    %831 = vmatprep.mubr.f32.mxu0 0.0
    %832 = vmatmul.mubr.f32.gmra.mrb[0].mxu0 %v329
    %v833 = vpop.f32.mrb[0].mxu0
    %v834 = vadd.f32 %v208, %v833
    %v835 = vpop.f32.mrb[0].mxu0
    %v836 = vadd.f32 %v208, %v835
    %837 = vmatprep.mubr.f32.mxu0 0.0
    %838 = vmatmul.mubr.f32.gmra.mrb[0].mxu0 %v332
    %v839 = vpop.f32.mrb[0].mxu0
    %v840 = vadd.f32 %v213, %v839
    %v841 = vpop.f32.mrb[0].mxu0
    %v842 = vadd.f32 %v213, %v841
    %843 = vmatprep.mubr.f32.mxu0 0.0
    %844 = vmatmul.mubr.f32.gmra.mrb[0].mxu0 %v335
    %v845 = vpop.f32.mrb[0].mxu0
    %v846 = vadd.f32 %v218, %v845
    %v847 = vpop.f32.mrb[0].mxu0
    %v848 = vadd.f32 %v218, %v847
    %849 = vmatprep.mubr.f32.mxu0 0.0
    %850 = vmatmul.mubr.f32.gmra.mrb[0].mxu0 %v338
    %v851 = vpop.f32.mrb[0].mxu0
    %v852 = vadd.f32 %v223, %v851
    %v853 = vpop.f32.mrb[0].mxu0
    %v854 = vadd.f32 %v223, %v853
    %855 = vmatprep.mubr.f32.mxu0 0.0
    %856 = vmatmul.mubr.f32.gmra.mrb[0].mxu0 %v341
    %v857 = vpop.f32.mrb[0].mxu0
    %v858 = vadd.f32 %v228, %v857
    %v859 = vpop.f32.mrb[0].mxu0
    %v860 = vadd.f32 %v228, %v859
    %861 = vmatprep.mubr.f32.mxu0 0.0
    %862 = vmatmul.mubr.f32.gmra.mrb[0].mxu0 %v344
    %v863 = vpop.f32.mrb[0].mxu0
    %v864 = vadd.f32 %v233, %v863
    %v865 = vpop.f32.mrb[0].mxu0
    %v866 = vadd.f32 %v233, %v865
    %867 = vmatprep.mubr.f32.mxu0 0.0
    %868 = vmatmul.mubr.f32.gmra.mrb[0].mxu0 %v347
    %v869 = vpop.f32.mrb[0].mxu0
    %v870 = vadd.f32 %v238, %v869
    %v871 = vpop.f32.mrb[0].mxu0
    %v872 = vadd.f32 %v238, %v871
    %873 = vmatprep.mubr.f32.mxu0 0.0
    %874 = vmatmul.mubr.f32.gmra.mrb[0].mxu0 %v350
    %v875 = vpop.f32.mrb[0].mxu0
    %v876 = vadd.f32 %v243, %v875
    %v877 = vpop.f32.mrb[0].mxu0
    %v878 = vadd.f32 %v243, %v877
    %879 = vmatprep.mubr.f32.mxu0 0.0
    %880 = vmatmul.mubr.f32.gmra.mrb[0].mxu0 %v353
    %v881 = vpop.f32.mrb[0].mxu0
    %v882 = vadd.f32 %v248, %v881
    %v883 = vpop.f32.mrb[0].mxu0
    %v884 = vadd.f32 %v248, %v883
    %885 = vdwg.mxu0
    %886 = vmatprep.subr.mxu0 %v366
    %887 = vmatpush1.msra.mxu0 %v364
    %888 = vmatprep.subr.mxu0 0.0
    %889 = vmatpush1.msra.mxu0 0.0
    %890 = vmatprep.subr.mxu0 0.0
    %891 = vmatpush1.msra.mxu0 0.0
    %892 = vmatprep.subr.mxu0 0.0
    %893 = vmatpush1.msra.mxu0 0.0
    %894 = vmatprep.subr.mxu0 0.0
    %895 = vmatpush1.msra.mxu0 0.0
    %896 = vmatprep.subr.mxu0 0.0
    %897 = vmatpush1.msra.mxu0 0.0
    %898 = vmatprep.subr.mxu0 0.0
    %899 = vmatpush1.msra.mxu0 0.0
    %900 = vmatprep.subr.mxu0 0.0
    %901 = vmatpush1.msra.mxu0 0.0
    %902 = vmatprep.subr.mxu0 0.0
    %903 = vmatpush1.msra.mxu0 0.0
    %904 = vmatprep.subr.mxu0 0.0
    %905 = vmatpush1.msra.mxu0 0.0
    %906 = vmatprep.subr.mxu0 0.0
    %907 = vmatpush1.msra.mxu0 0.0
    %908 = vmatprep.subr.mxu0 0.0
    %909 = vmatpush1.msra.mxu0 0.0
    %910 = vmatprep.subr.mxu0 0.0
    %911 = vmatpush1.msra.mxu0 0.0
    %912 = vmatprep.subr.mxu0 0.0
    %913 = vmatpush1.msra.mxu0 0.0
    %914 = vmatprep.subr.mxu0 0.0
    %915 = vmatpush1.msra.mxu0 0.0
    %916 = vmatprep.subr.mxu0 0.0
    %917 = vmatpush1.msra.mxu0 0.0
    %918 = vmatprep.subr.mxu0 0.0
    %919 = vmatpush1.msra.mxu0 0.0
    %920 = vmatprep.subr.mxu0 0.0
    %921 = vmatpush1.msra.mxu0 0.0
    %922 = vmatprep.subr.mxu0 0.0
    %923 = vmatpush1.msra.mxu0 0.0
    %924 = vmatprep.subr.mxu0 0.0
    %925 = vmatpush1.msra.mxu0 0.0
    %926 = vmatprep.subr.mxu0 0.0
    %927 = vmatpush1.msra.mxu0 0.0
    %928 = vmatprep.subr.mxu0 0.0
    %929 = vmatpush1.msra.mxu0 0.0
    %930 = vmatprep.subr.mxu0 0.0
    %931 = vmatpush1.msra.mxu0 0.0
    %932 = vmatprep.subr.mxu0 0.0
    %933 = vmatpush1.msra.mxu0 0.0
    %934 = vmatprep.subr.mxu0 0.0
    %935 = vmatpush1.msra.mxu0 0.0
    %936 = vmatprep.subr.mxu0 0.0
    %937 = vmatpush1.msra.mxu0 0.0
    %938 = vmatprep.subr.mxu0 0.0
    %939 = vmatpush1.msra.mxu0 0.0
    %940 = vmatprep.subr.mxu0 0.0
    %941 = vmatpush1.msra.mxu0 0.0
    %942 = vmatprep.subr.mxu0 0.0
    %943 = vmatpush1.msra.mxu0 0.0
    %944 = vmatprep.subr.mxu0 0.0
    %945 = vmatpush1.msra.mxu0 0.0
    %946 = vmatprep.subr.mxu0 0.0
    %947 = vmatpush1.msra.mxu0 0.0
    %948 = vmatprep.subr.mxu0 0.0
    %949 = vmatpush1.msra.mxu0 0.0
    %950 = vmatprep.mubr.f32.mxu0 0.0
    %951 = vmatmul.mubr.f32.gmra.mrb[0].mxu0 %v260
    %v952 = vpop.f32.mrb[0].mxu0
    %v953 = vadd.f32 %v93, %v952
    %v954 = vpop.f32.mrb[0].mxu0
    %v955 = vadd.f32 %v93, %v954
    %956 = vmatprep.mubr.f32.mxu0 0.0
    %957 = vmatmul.mubr.f32.gmra.mrb[0].mxu0 %v263
    %v958 = vpop.f32.mrb[0].mxu0
    %v959 = vadd.f32 %v98, %v958
    %v960 = vpop.f32.mrb[0].mxu0
    %v961 = vadd.f32 %v98, %v960
    %962 = vmatprep.mubr.f32.mxu0 0.0
    %963 = vmatmul.mubr.f32.gmra.mrb[0].mxu0 %v266
    %v964 = vpop.f32.mrb[0].mxu0
    %v965 = vadd.f32 %v103, %v964
    %v966 = vpop.f32.mrb[0].mxu0
    %v967 = vadd.f32 %v103, %v966
    %968 = vmatprep.mubr.f32.mxu0 0.0
    %969 = vmatmul.mubr.f32.gmra.mrb[0].mxu0 %v269
    %v970 = vpop.f32.mrb[0].mxu0
    %v971 = vadd.f32 %v108, %v970
    %v972 = vpop.f32.mrb[0].mxu0
    %v973 = vadd.f32 %v108, %v972
    %974 = vmatprep.mubr.f32.mxu0 0.0
    %975 = vmatmul.mubr.f32.gmra.mrb[0].mxu0 %v272
    %v976 = vpop.f32.mrb[0].mxu0
    %v977 = vadd.f32 %v113, %v976
    %v978 = vpop.f32.mrb[0].mxu0
    %v979 = vadd.f32 %v113, %v978
    %980 = vmatprep.mubr.f32.mxu0 0.0
    %981 = vmatmul.mubr.f32.gmra.mrb[0].mxu0 %v275
    %v982 = vpop.f32.mrb[0].mxu0
    %v983 = vadd.f32 %v118, %v982
    %v984 = vpop.f32.mrb[0].mxu0
    %v985 = vadd.f32 %v118, %v984
    %986 = vmatprep.mubr.f32.mxu0 0.0
    %987 = vmatmul.mubr.f32.gmra.mrb[0].mxu0 %v278
    %v988 = vpop.f32.mrb[0].mxu0
    %v989 = vadd.f32 %v123, %v988
    %v990 = vpop.f32.mrb[0].mxu0
    %v991 = vadd.f32 %v123, %v990
    %992 = vmatprep.mubr.f32.mxu0 0.0
    %993 = vmatmul.mubr.f32.gmra.mrb[0].mxu0 %v281
    %v994 = vpop.f32.mrb[0].mxu0
    %v995 = vadd.f32 %v128, %v994
    %v996 = vpop.f32.mrb[0].mxu0
    %v997 = vadd.f32 %v128, %v996
    %998 = vmatprep.mubr.f32.mxu0 0.0
    %999 = vmatmul.mubr.f32.gmra.mrb[0].mxu0 %v284
    %v1000 = vpop.f32.mrb[0].mxu0
    %v1001 = vadd.f32 %v133, %v1000
    %v1002 = vpop.f32.mrb[0].mxu0
    %v1003 = vadd.f32 %v133, %v1002
    %1004 = vmatprep.mubr.f32.mxu0 0.0
    %1005 = vmatmul.mubr.f32.gmra.mrb[0].mxu0 %v287
    %v1006 = vpop.f32.mrb[0].mxu0
    %v1007 = vadd.f32 %v138, %v1006
    %v1008 = vpop.f32.mrb[0].mxu0
    %v1009 = vadd.f32 %v138, %v1008
    %1010 = vmatprep.mubr.f32.mxu0 0.0
    %1011 = vmatmul.mubr.f32.gmra.mrb[0].mxu0 %v290
    %v1012 = vpop.f32.mrb[0].mxu0
    %v1013 = vadd.f32 %v143, %v1012
    %v1014 = vpop.f32.mrb[0].mxu0
    %v1015 = vadd.f32 %v143, %v1014
    %1016 = vmatprep.mubr.f32.mxu0 0.0
    %1017 = vmatmul.mubr.f32.gmra.mrb[0].mxu0 %v293
    %v1018 = vpop.f32.mrb[0].mxu0
    %v1019 = vadd.f32 %v148, %v1018
    %v1020 = vpop.f32.mrb[0].mxu0
    %v1021 = vadd.f32 %v148, %v1020
    %1022 = vmatprep.mubr.f32.mxu0 0.0
    %1023 = vmatmul.mubr.f32.gmra.mrb[0].mxu0 %v296
    %v1024 = vpop.f32.mrb[0].mxu0
    %v1025 = vadd.f32 %v153, %v1024
    %v1026 = vpop.f32.mrb[0].mxu0
    %v1027 = vadd.f32 %v153, %v1026
    %1028 = vmatprep.mubr.f32.mxu0 0.0
    %1029 = vmatmul.mubr.f32.gmra.mrb[0].mxu0 %v299
    %v1030 = vpop.f32.mrb[0].mxu0
    %v1031 = vadd.f32 %v158, %v1030
    %v1032 = vpop.f32.mrb[0].mxu0
    %v1033 = vadd.f32 %v158, %v1032
    %1034 = vmatprep.mubr.f32.mxu0 0.0
    %1035 = vmatmul.mubr.f32.gmra.mrb[0].mxu0 %v302
    %v1036 = vpop.f32.mrb[0].mxu0
    %v1037 = vadd.f32 %v163, %v1036
    %v1038 = vpop.f32.mrb[0].mxu0
    %v1039 = vadd.f32 %v163, %v1038
    %1040 = vmatprep.mubr.f32.mxu0 0.0
    %1041 = vmatmul.mubr.f32.gmra.mrb[0].mxu0 %v305
    %v1042 = vpop.f32.mrb[0].mxu0
    %v1043 = vadd.f32 %v168, %v1042
    %v1044 = vpop.f32.mrb[0].mxu0
    %v1045 = vadd.f32 %v168, %v1044
    %1046 = vmatprep.mubr.f32.mxu0 0.0
    %1047 = vmatmul.mubr.f32.gmra.mrb[0].mxu0 %v308
    %v1048 = vpop.f32.mrb[0].mxu0
    %v1049 = vadd.f32 %v173, %v1048
    %v1050 = vpop.f32.mrb[0].mxu0
    %v1051 = vadd.f32 %v173, %v1050
    %1052 = vmatprep.mubr.f32.mxu0 0.0
    %1053 = vmatmul.mubr.f32.gmra.mrb[0].mxu0 %v311
    %v1054 = vpop.f32.mrb[0].mxu0
    %v1055 = vadd.f32 %v178, %v1054
    %v1056 = vpop.f32.mrb[0].mxu0
    %v1057 = vadd.f32 %v178, %v1056
    %1058 = vmatprep.mubr.f32.mxu0 0.0
    %1059 = vmatmul.mubr.f32.gmra.mrb[0].mxu0 %v314
    %v1060 = vpop.f32.mrb[0].mxu0
    %v1061 = vadd.f32 %v183, %v1060
    %v1062 = vpop.f32.mrb[0].mxu0
    %v1063 = vadd.f32 %v183, %v1062
    %1064 = vmatprep.mubr.f32.mxu0 0.0
    %1065 = vmatmul.mubr.f32.gmra.mrb[0].mxu0 %v317
    %v1066 = vpop.f32.mrb[0].mxu0
    %v1067 = vadd.f32 %v188, %v1066
    %v1068 = vpop.f32.mrb[0].mxu0
    %v1069 = vadd.f32 %v188, %v1068
    %1070 = vmatprep.mubr.f32.mxu0 0.0
    %1071 = vmatmul.mubr.f32.gmra.mrb[0].mxu0 %v320
    %v1072 = vpop.f32.mrb[0].mxu0
    %v1073 = vadd.f32 %v193, %v1072
    %v1074 = vpop.f32.mrb[0].mxu0
    %v1075 = vadd.f32 %v193, %v1074
    %1076 = vmatprep.mubr.f32.mxu0 0.0
    %1077 = vmatmul.mubr.f32.gmra.mrb[0].mxu0 %v323
    %v1078 = vpop.f32.mrb[0].mxu0
    %v1079 = vadd.f32 %v198, %v1078
    %v1080 = vpop.f32.mrb[0].mxu0
    %v1081 = vadd.f32 %v198, %v1080
    %1082 = vmatprep.mubr.f32.mxu0 0.0
    %1083 = vmatmul.mubr.f32.gmra.mrb[0].mxu0 %v326
    %v1084 = vpop.f32.mrb[0].mxu0
    %v1085 = vadd.f32 %v203, %v1084
    %v1086 = vpop.f32.mrb[0].mxu0
    %v1087 = vadd.f32 %v203, %v1086
    %1088 = vmatprep.mubr.f32.mxu0 0.0
    %1089 = vmatmul.mubr.f32.gmra.mrb[0].mxu0 %v329
    %v1090 = vpop.f32.mrb[0].mxu0
    %v1091 = vadd.f32 %v208, %v1090
    %v1092 = vpop.f32.mrb[0].mxu0
    %v1093 = vadd.f32 %v208, %v1092
    %1094 = vmatprep.mubr.f32.mxu0 0.0
    %1095 = vmatmul.mubr.f32.gmra.mrb[0].mxu0 %v332
    %v1096 = vpop.f32.mrb[0].mxu0
    %v1097 = vadd.f32 %v213, %v1096
    %v1098 = vpop.f32.mrb[0].mxu0
    %v1099 = vadd.f32 %v213, %v1098
    %1100 = vmatprep.mubr.f32.mxu0 0.0
    %1101 = vmatmul.mubr.f32.gmra.mrb[0].mxu0 %v335
    %v1102 = vpop.f32.mrb[0].mxu0
    %v1103 = vadd.f32 %v218, %v1102
    %v1104 = vpop.f32.mrb[0].mxu0
    %v1105 = vadd.f32 %v218, %v1104
    %1106 = vmatprep.mubr.f32.mxu0 0.0
    %1107 = vmatmul.mubr.f32.gmra.mrb[0].mxu0 %v338
    %v1108 = vpop.f32.mrb[0].mxu0
    %v1109 = vadd.f32 %v223, %v1108
    %v1110 = vpop.f32.mrb[0].mxu0
    %v1111 = vadd.f32 %v223, %v1110
    %1112 = vmatprep.mubr.f32.mxu0 0.0
    %1113 = vmatmul.mubr.f32.gmra.mrb[0].mxu0 %v341
    %v1114 = vpop.f32.mrb[0].mxu0
    %v1115 = vadd.f32 %v228, %v1114
    %v1116 = vpop.f32.mrb[0].mxu0
    %v1117 = vadd.f32 %v228, %v1116
    %1118 = vmatprep.mubr.f32.mxu0 0.0
    %1119 = vmatmul.mubr.f32.gmra.mrb[0].mxu0 %v344
    %v1120 = vpop.f32.mrb[0].mxu0
    %v1121 = vadd.f32 %v233, %v1120
    %v1122 = vpop.f32.mrb[0].mxu0
    %v1123 = vadd.f32 %v233, %v1122
    %1124 = vmatprep.mubr.f32.mxu0 0.0
    %1125 = vmatmul.mubr.f32.gmra.mrb[0].mxu0 %v347
    %v1126 = vpop.f32.mrb[0].mxu0
    %v1127 = vadd.f32 %v238, %v1126
    %v1128 = vpop.f32.mrb[0].mxu0
    %v1129 = vadd.f32 %v238, %v1128
    %1130 = vmatprep.mubr.f32.mxu0 0.0
    %1131 = vmatmul.mubr.f32.gmra.mrb[0].mxu0 %v350
    %v1132 = vpop.f32.mrb[0].mxu0
    %v1133 = vadd.f32 %v243, %v1132
    %v1134 = vpop.f32.mrb[0].mxu0
    %v1135 = vadd.f32 %v243, %v1134
    %1136 = vmatprep.mubr.f32.mxu0 0.0
    %1137 = vmatmul.mubr.f32.gmra.mrb[0].mxu0 %v353
    %v1138 = vpop.f32.mrb[0].mxu0
    %v1139 = vadd.f32 %v248, %v1138
    %v1140 = vpop.f32.mrb[0].mxu0
    %v1141 = vadd.f32 %v248, %v1140
    %1142 = vdwg.mxu0
    %1143 = vmatprep.subr.mxu0 %v370
    %1144 = vmatpush1.msra.mxu0 %v368
    %1145 = vmatprep.subr.mxu0 0.0
    %1146 = vmatpush1.msra.mxu0 0.0
    %1147 = vmatprep.subr.mxu0 0.0
    %1148 = vmatpush1.msra.mxu0 0.0
    %1149 = vmatprep.subr.mxu0 0.0
    %1150 = vmatpush1.msra.mxu0 0.0
    %1151 = vmatprep.subr.mxu0 0.0
    %1152 = vmatpush1.msra.mxu0 0.0
    %1153 = vmatprep.subr.mxu0 0.0
    %1154 = vmatpush1.msra.mxu0 0.0
    %1155 = vmatprep.subr.mxu0 0.0
    %1156 = vmatpush1.msra.mxu0 0.0
    %1157 = vmatprep.subr.mxu0 0.0
    %1158 = vmatpush1.msra.mxu0 0.0
    %1159 = vmatprep.subr.mxu0 0.0
    %1160 = vmatpush1.msra.mxu0 0.0
    %1161 = vmatprep.subr.mxu0 0.0
    %1162 = vmatpush1.msra.mxu0 0.0
    %1163 = vmatprep.subr.mxu0 0.0
    %1164 = vmatpush1.msra.mxu0 0.0
    %1165 = vmatprep.subr.mxu0 0.0
    %1166 = vmatpush1.msra.mxu0 0.0
    %1167 = vmatprep.subr.mxu0 0.0
    %1168 = vmatpush1.msra.mxu0 0.0
    %1169 = vmatprep.subr.mxu0 0.0
    %1170 = vmatpush1.msra.mxu0 0.0
    %1171 = vmatprep.subr.mxu0 0.0
    %1172 = vmatpush1.msra.mxu0 0.0
    %1173 = vmatprep.subr.mxu0 0.0
    %1174 = vmatpush1.msra.mxu0 0.0
    %1175 = vmatprep.subr.mxu0 0.0
    %1176 = vmatpush1.msra.mxu0 0.0
    %1177 = vmatprep.subr.mxu0 0.0
    %1178 = vmatpush1.msra.mxu0 0.0
    %1179 = vmatprep.subr.mxu0 0.0
    %1180 = vmatpush1.msra.mxu0 0.0
    %1181 = vmatprep.subr.mxu0 0.0
    %1182 = vmatpush1.msra.mxu0 0.0
    %1183 = vmatprep.subr.mxu0 0.0
    %1184 = vmatpush1.msra.mxu0 0.0
    %1185 = vmatprep.subr.mxu0 0.0
    %1186 = vmatpush1.msra.mxu0 0.0
    %1187 = vmatprep.subr.mxu0 0.0
    %1188 = vmatpush1.msra.mxu0 0.0
    %1189 = vmatprep.subr.mxu0 0.0
    %1190 = vmatpush1.msra.mxu0 0.0
    %1191 = vmatprep.subr.mxu0 0.0
    %1192 = vmatpush1.msra.mxu0 0.0
    %1193 = vmatprep.subr.mxu0 0.0
    %1194 = vmatpush1.msra.mxu0 0.0
    %1195 = vmatprep.subr.mxu0 0.0
    %1196 = vmatpush1.msra.mxu0 0.0
    %1197 = vmatprep.subr.mxu0 0.0
    %1198 = vmatpush1.msra.mxu0 0.0
    %1199 = vmatprep.subr.mxu0 0.0
    %1200 = vmatpush1.msra.mxu0 0.0
    %1201 = vmatprep.subr.mxu0 0.0
    %1202 = vmatpush1.msra.mxu0 0.0
    %1203 = vmatprep.subr.mxu0 0.0
    %1204 = vmatpush1.msra.mxu0 0.0
    %1205 = vmatprep.subr.mxu0 0.0
    %1206 = vmatpush1.msra.mxu0 0.0
    %1207 = vmatprep.mubr.f32.mxu0 0.0
    %1208 = vmatmul.mubr.f32.gmra.mrb[0].mxu0 %v260
    %v1209 = vpop.f32.mrb[0].mxu0
    %v1210 = vadd.f32 %v93, %v1209
    %v1211 = vpop.f32.mrb[0].mxu0
    %v1212 = vadd.f32 %v93, %v1211
    %1213 = vmatprep.mubr.f32.mxu0 0.0
    %1214 = vmatmul.mubr.f32.gmra.mrb[0].mxu0 %v263
    %v1215 = vpop.f32.mrb[0].mxu0
    %v1216 = vadd.f32 %v98, %v1215
    %v1217 = vpop.f32.mrb[0].mxu0
    %v1218 = vadd.f32 %v98, %v1217
    %1219 = vmatprep.mubr.f32.mxu0 0.0
    %1220 = vmatmul.mubr.f32.gmra.mrb[0].mxu0 %v266
    %v1221 = vpop.f32.mrb[0].mxu0
    %v1222 = vadd.f32 %v103, %v1221
    %v1223 = vpop.f32.mrb[0].mxu0
    %v1224 = vadd.f32 %v103, %v1223
    %1225 = vmatprep.mubr.f32.mxu0 0.0
    %1226 = vmatmul.mubr.f32.gmra.mrb[0].mxu0 %v269
    %v1227 = vpop.f32.mrb[0].mxu0
    %v1228 = vadd.f32 %v108, %v1227
    %v1229 = vpop.f32.mrb[0].mxu0
    %v1230 = vadd.f32 %v108, %v1229
    %1231 = vmatprep.mubr.f32.mxu0 0.0
    %1232 = vmatmul.mubr.f32.gmra.mrb[0].mxu0 %v272
    %v1233 = vpop.f32.mrb[0].mxu0
    %v1234 = vadd.f32 %v113, %v1233
    %v1235 = vpop.f32.mrb[0].mxu0
    %v1236 = vadd.f32 %v113, %v1235
    %1237 = vmatprep.mubr.f32.mxu0 0.0
    %1238 = vmatmul.mubr.f32.gmra.mrb[0].mxu0 %v275
    %v1239 = vpop.f32.mrb[0].mxu0
    %v1240 = vadd.f32 %v118, %v1239
    %v1241 = vpop.f32.mrb[0].mxu0
    %v1242 = vadd.f32 %v118, %v1241
    %1243 = vmatprep.mubr.f32.mxu0 0.0
    %1244 = vmatmul.mubr.f32.gmra.mrb[0].mxu0 %v278
    %v1245 = vpop.f32.mrb[0].mxu0
    %v1246 = vadd.f32 %v123, %v1245
    %v1247 = vpop.f32.mrb[0].mxu0
    %v1248 = vadd.f32 %v123, %v1247
    %1249 = vmatprep.mubr.f32.mxu0 0.0
    %1250 = vmatmul.mubr.f32.gmra.mrb[0].mxu0 %v281
    %v1251 = vpop.f32.mrb[0].mxu0
    %v1252 = vadd.f32 %v128, %v1251
    %v1253 = vpop.f32.mrb[0].mxu0
    %v1254 = vadd.f32 %v128, %v1253
    %1255 = vmatprep.mubr.f32.mxu0 0.0
    %1256 = vmatmul.mubr.f32.gmra.mrb[0].mxu0 %v284
    %v1257 = vpop.f32.mrb[0].mxu0
    %v1258 = vadd.f32 %v133, %v1257
    %v1259 = vpop.f32.mrb[0].mxu0
    %v1260 = vadd.f32 %v133, %v1259
    %1261 = vmatprep.mubr.f32.mxu0 0.0
    %1262 = vmatmul.mubr.f32.gmra.mrb[0].mxu0 %v287
    %v1263 = vpop.f32.mrb[0].mxu0
    %v1264 = vadd.f32 %v138, %v1263
    %v1265 = vpop.f32.mrb[0].mxu0
    %v1266 = vadd.f32 %v138, %v1265
    %1267 = vmatprep.mubr.f32.mxu0 0.0
    %1268 = vmatmul.mubr.f32.gmra.mrb[0].mxu0 %v290
    %v1269 = vpop.f32.mrb[0].mxu0
    %v1270 = vadd.f32 %v143, %v1269
    %v1271 = vpop.f32.mrb[0].mxu0
    %v1272 = vadd.f32 %v143, %v1271
    %1273 = vmatprep.mubr.f32.mxu0 0.0
    %1274 = vmatmul.mubr.f32.gmra.mrb[0].mxu0 %v293
    %v1275 = vpop.f32.mrb[0].mxu0
    %v1276 = vadd.f32 %v148, %v1275
    %v1277 = vpop.f32.mrb[0].mxu0
    %v1278 = vadd.f32 %v148, %v1277
    %1279 = vmatprep.mubr.f32.mxu0 0.0
    %1280 = vmatmul.mubr.f32.gmra.mrb[0].mxu0 %v296
    %v1281 = vpop.f32.mrb[0].mxu0
    %v1282 = vadd.f32 %v153, %v1281
    %v1283 = vpop.f32.mrb[0].mxu0
    %v1284 = vadd.f32 %v153, %v1283
    %1285 = vmatprep.mubr.f32.mxu0 0.0
    %1286 = vmatmul.mubr.f32.gmra.mrb[0].mxu0 %v299
    %v1287 = vpop.f32.mrb[0].mxu0
    %v1288 = vadd.f32 %v158, %v1287
    %v1289 = vpop.f32.mrb[0].mxu0
    %v1290 = vadd.f32 %v158, %v1289
    %1291 = vmatprep.mubr.f32.mxu0 0.0
    %1292 = vmatmul.mubr.f32.gmra.mrb[0].mxu0 %v302
    %v1293 = vpop.f32.mrb[0].mxu0
    %v1294 = vadd.f32 %v163, %v1293
    %v1295 = vpop.f32.mrb[0].mxu0
    %v1296 = vadd.f32 %v163, %v1295
    %1297 = vmatprep.mubr.f32.mxu0 0.0
    %1298 = vmatmul.mubr.f32.gmra.mrb[0].mxu0 %v305
    %v1299 = vpop.f32.mrb[0].mxu0
    %v1300 = vadd.f32 %v168, %v1299
    %v1301 = vpop.f32.mrb[0].mxu0
    %v1302 = vadd.f32 %v168, %v1301
    %1303 = vmatprep.mubr.f32.mxu0 0.0
    %1304 = vmatmul.mubr.f32.gmra.mrb[0].mxu0 %v308
    %v1305 = vpop.f32.mrb[0].mxu0
    %v1306 = vadd.f32 %v173, %v1305
    %v1307 = vpop.f32.mrb[0].mxu0
    %v1308 = vadd.f32 %v173, %v1307
    %1309 = vmatprep.mubr.f32.mxu0 0.0
    %1310 = vmatmul.mubr.f32.gmra.mrb[0].mxu0 %v311
    %v1311 = vpop.f32.mrb[0].mxu0
    %v1312 = vadd.f32 %v178, %v1311
    %v1313 = vpop.f32.mrb[0].mxu0
    %v1314 = vadd.f32 %v178, %v1313
    %1315 = vmatprep.mubr.f32.mxu0 0.0
    %1316 = vmatmul.mubr.f32.gmra.mrb[0].mxu0 %v314
    %v1317 = vpop.f32.mrb[0].mxu0
    %v1318 = vadd.f32 %v183, %v1317
    %v1319 = vpop.f32.mrb[0].mxu0
    %v1320 = vadd.f32 %v183, %v1319
    %1321 = vmatprep.mubr.f32.mxu0 0.0
    %1322 = vmatmul.mubr.f32.gmra.mrb[0].mxu0 %v317
    %v1323 = vpop.f32.mrb[0].mxu0
    %v1324 = vadd.f32 %v188, %v1323
    %v1325 = vpop.f32.mrb[0].mxu0
    %v1326 = vadd.f32 %v188, %v1325
    %1327 = vmatprep.mubr.f32.mxu0 0.0
    %1328 = vmatmul.mubr.f32.gmra.mrb[0].mxu0 %v320
    %v1329 = vpop.f32.mrb[0].mxu0
    %v1330 = vadd.f32 %v193, %v1329
    %v1331 = vpop.f32.mrb[0].mxu0
    %v1332 = vadd.f32 %v193, %v1331
    %1333 = vmatprep.mubr.f32.mxu0 0.0
    %1334 = vmatmul.mubr.f32.gmra.mrb[0].mxu0 %v323
    %v1335 = vpop.f32.mrb[0].mxu0
    %v1336 = vadd.f32 %v198, %v1335
    %v1337 = vpop.f32.mrb[0].mxu0
    %v1338 = vadd.f32 %v198, %v1337
    %1339 = vmatprep.mubr.f32.mxu0 0.0
    %1340 = vmatmul.mubr.f32.gmra.mrb[0].mxu0 %v326
    %v1341 = vpop.f32.mrb[0].mxu0
    %v1342 = vadd.f32 %v203, %v1341
    %v1343 = vpop.f32.mrb[0].mxu0
    %v1344 = vadd.f32 %v203, %v1343
    %1345 = vmatprep.mubr.f32.mxu0 0.0
    %1346 = vmatmul.mubr.f32.gmra.mrb[0].mxu0 %v329
    %v1347 = vpop.f32.mrb[0].mxu0
    %v1348 = vadd.f32 %v208, %v1347
    %v1349 = vpop.f32.mrb[0].mxu0
    %v1350 = vadd.f32 %v208, %v1349
    %1351 = vmatprep.mubr.f32.mxu0 0.0
    %1352 = vmatmul.mubr.f32.gmra.mrb[0].mxu0 %v332
    %v1353 = vpop.f32.mrb[0].mxu0
    %v1354 = vadd.f32 %v213, %v1353
    %v1355 = vpop.f32.mrb[0].mxu0
    %v1356 = vadd.f32 %v213, %v1355
    %1357 = vmatprep.mubr.f32.mxu0 0.0
    %1358 = vmatmul.mubr.f32.gmra.mrb[0].mxu0 %v335
    %v1359 = vpop.f32.mrb[0].mxu0
    %v1360 = vadd.f32 %v218, %v1359
    %v1361 = vpop.f32.mrb[0].mxu0
    %v1362 = vadd.f32 %v218, %v1361
    %1363 = vmatprep.mubr.f32.mxu0 0.0
    %1364 = vmatmul.mubr.f32.gmra.mrb[0].mxu0 %v338
    %v1365 = vpop.f32.mrb[0].mxu0
    %v1366 = vadd.f32 %v223, %v1365
    %v1367 = vpop.f32.mrb[0].mxu0
    %v1368 = vadd.f32 %v223, %v1367
    %1369 = vmatprep.mubr.f32.mxu0 0.0
    %1370 = vmatmul.mubr.f32.gmra.mrb[0].mxu0 %v341
    %v1371 = vpop.f32.mrb[0].mxu0
    %v1372 = vadd.f32 %v228, %v1371
    %v1373 = vpop.f32.mrb[0].mxu0
    %v1374 = vadd.f32 %v228, %v1373
    %1375 = vmatprep.mubr.f32.mxu0 0.0
    %1376 = vmatmul.mubr.f32.gmra.mrb[0].mxu0 %v344
    %v1377 = vpop.f32.mrb[0].mxu0
    %v1378 = vadd.f32 %v233, %v1377
    %v1379 = vpop.f32.mrb[0].mxu0
    %v1380 = vadd.f32 %v233, %v1379
    %1381 = vmatprep.mubr.f32.mxu0 0.0
    %1382 = vmatmul.mubr.f32.gmra.mrb[0].mxu0 %v347
    %v1383 = vpop.f32.mrb[0].mxu0
    %v1384 = vadd.f32 %v238, %v1383
    %v1385 = vpop.f32.mrb[0].mxu0
    %v1386 = vadd.f32 %v238, %v1385
    %1387 = vmatprep.mubr.f32.mxu0 0.0
    %1388 = vmatmul.mubr.f32.gmra.mrb[0].mxu0 %v350
    %v1389 = vpop.f32.mrb[0].mxu0
    %v1390 = vadd.f32 %v243, %v1389
    %v1391 = vpop.f32.mrb[0].mxu0
    %v1392 = vadd.f32 %v243, %v1391
    %1393 = vmatprep.mubr.f32.mxu0 0.0
    %1394 = vmatmul.mubr.f32.gmra.mrb[0].mxu0 %v353
    %v1395 = vpop.f32.mrb[0].mxu0
    %v1396 = vadd.f32 %v248, %v1395
    %v1397 = vpop.f32.mrb[0].mxu0
    %v1398 = vadd.f32 %v248, %v1397
    %1399 = vdwg.mxu0
    %v1400 = vmul.f32 %v439, 0.5
    %v1401 = vmul.f32 %v441, 0.5
    %v1402 = vmul.f32 %v696, 0.5
    %v1403 = vmul.f32 %v698, 0.5
    %v1404 = vmul.f32 %v953, 0.5
    %v1405 = vmul.f32 %v955, 0.5
    %v1406 = vmul.f32 %v1210, 0.5
    %v1407 = vmul.f32 %v1212, 0.5
    %v1408 = vmul.f32 %v445, 0.5
    %v1409 = vmul.f32 %v447, 0.5
    %v1410 = vmul.f32 %v702, 0.5
    %v1411 = vmul.f32 %v704, 0.5
    %v1412 = vmul.f32 %v959, 0.5
    %v1413 = vmul.f32 %v961, 0.5
    %v1414 = vmul.f32 %v1216, 0.5
    %v1415 = vmul.f32 %v1218, 0.5
    %v1416 = vmul.f32 %v451, 0.5
    %v1417 = vmul.f32 %v453, 0.5
    %v1418 = vmul.f32 %v708, 0.5
    %v1419 = vmul.f32 %v710, 0.5
    %v1420 = vmul.f32 %v965, 0.5
    %v1421 = vmul.f32 %v967, 0.5
    %v1422 = vmul.f32 %v1222, 0.5
    %v1423 = vmul.f32 %v1224, 0.5
    %v1424 = vmul.f32 %v457, 0.5
    %v1425 = vmul.f32 %v459, 0.5
    %v1426 = vmul.f32 %v714, 0.5
    %v1427 = vmul.f32 %v716, 0.5
    %v1428 = vmul.f32 %v971, 0.5
    %v1429 = vmul.f32 %v973, 0.5
    %v1430 = vmul.f32 %v1228, 0.5
    %v1431 = vmul.f32 %v1230, 0.5
    %v1432 = vmul.f32 %v463, 0.5
    %v1433 = vmul.f32 %v465, 0.5
    %v1434 = vmul.f32 %v720, 0.5
    %v1435 = vmul.f32 %v722, 0.5
    %v1436 = vmul.f32 %v977, 0.5
    %v1437 = vmul.f32 %v979, 0.5
    %v1438 = vmul.f32 %v1234, 0.5
    %v1439 = vmul.f32 %v1236, 0.5
    %v1440 = vmul.f32 %v469, 0.5
    %v1441 = vmul.f32 %v471, 0.5
    %v1442 = vmul.f32 %v726, 0.5
    %v1443 = vmul.f32 %v728, 0.5
    %v1444 = vmul.f32 %v983, 0.5
    %v1445 = vmul.f32 %v985, 0.5
    %v1446 = vmul.f32 %v1240, 0.5
    %v1447 = vmul.f32 %v1242, 0.5
    %v1448 = vmul.f32 %v475, 0.5
    %v1449 = vmul.f32 %v477, 0.5
    %v1450 = vmul.f32 %v732, 0.5
    %v1451 = vmul.f32 %v734, 0.5
    %v1452 = vmul.f32 %v989, 0.5
    %v1453 = vmul.f32 %v991, 0.5
    %v1454 = vmul.f32 %v1246, 0.5
    %v1455 = vmul.f32 %v1248, 0.5
    %v1456 = vmul.f32 %v481, 0.5
    %v1457 = vmul.f32 %v483, 0.5
    %v1458 = vmul.f32 %v738, 0.5
    %v1459 = vmul.f32 %v740, 0.5
    %v1460 = vmul.f32 %v995, 0.5
    %v1461 = vmul.f32 %v997, 0.5
    %v1462 = vmul.f32 %v1252, 0.5
    %v1463 = vmul.f32 %v1254, 0.5
    %v1464 = vmul.f32 %v487, 0.5
    %v1465 = vmul.f32 %v489, 0.5
    %v1466 = vmul.f32 %v744, 0.5
    %v1467 = vmul.f32 %v746, 0.5
    %v1468 = vmul.f32 %v1001, 0.5
    %v1469 = vmul.f32 %v1003, 0.5
    %v1470 = vmul.f32 %v1258, 0.5
    %v1471 = vmul.f32 %v1260, 0.5
    %v1472 = vmul.f32 %v493, 0.5
    %v1473 = vmul.f32 %v495, 0.5
    %v1474 = vmul.f32 %v750, 0.5
    %v1475 = vmul.f32 %v752, 0.5
    %v1476 = vmul.f32 %v1007, 0.5
    %v1477 = vmul.f32 %v1009, 0.5
    %v1478 = vmul.f32 %v1264, 0.5
    %v1479 = vmul.f32 %v1266, 0.5
    %v1480 = vmul.f32 %v499, 0.5
    %v1481 = vmul.f32 %v501, 0.5
    %v1482 = vmul.f32 %v756, 0.5
    %v1483 = vmul.f32 %v758, 0.5
    %v1484 = vmul.f32 %v1013, 0.5
    %v1485 = vmul.f32 %v1015, 0.5
    %v1486 = vmul.f32 %v1270, 0.5
    %v1487 = vmul.f32 %v1272, 0.5
    %v1488 = vmul.f32 %v505, 0.5
    %v1489 = vmul.f32 %v507, 0.5
    %v1490 = vmul.f32 %v762, 0.5
    %v1491 = vmul.f32 %v764, 0.5
    %v1492 = vmul.f32 %v1019, 0.5
    %v1493 = vmul.f32 %v1021, 0.5
    %v1494 = vmul.f32 %v1276, 0.5
    %v1495 = vmul.f32 %v1278, 0.5
    %v1496 = vmul.f32 %v511, 0.5
    %v1497 = vmul.f32 %v513, 0.5
    %v1498 = vmul.f32 %v768, 0.5
    %v1499 = vmul.f32 %v770, 0.5
    %v1500 = vmul.f32 %v1025, 0.5
    %v1501 = vmul.f32 %v1027, 0.5
    %v1502 = vmul.f32 %v1282, 0.5
    %v1503 = vmul.f32 %v1284, 0.5
    %v1504 = vmul.f32 %v517, 0.5
    %v1505 = vmul.f32 %v519, 0.5
    %v1506 = vmul.f32 %v774, 0.5
    %v1507 = vmul.f32 %v776, 0.5
    %v1508 = vmul.f32 %v1031, 0.5
    %v1509 = vmul.f32 %v1033, 0.5
    %v1510 = vmul.f32 %v1288, 0.5
    %v1511 = vmul.f32 %v1290, 0.5
    %v1512 = vmul.f32 %v523, 0.5
    %v1513 = vmul.f32 %v525, 0.5
    %v1514 = vmul.f32 %v780, 0.5
    %v1515 = vmul.f32 %v782, 0.5
    %v1516 = vmul.f32 %v1037, 0.5
    %v1517 = vmul.f32 %v1039, 0.5
    %v1518 = vmul.f32 %v1294, 0.5
    %v1519 = vmul.f32 %v1296, 0.5
    %v1520 = vmul.f32 %v529, 0.5
    %v1521 = vmul.f32 %v531, 0.5
    %v1522 = vmul.f32 %v786, 0.5
    %v1523 = vmul.f32 %v788, 0.5
    %v1524 = vmul.f32 %v1043, 0.5
    %v1525 = vmul.f32 %v1045, 0.5
    %v1526 = vmul.f32 %v1300, 0.5
    %v1527 = vmul.f32 %v1302, 0.5
    %v1528 = vtanh.pop %v1400
    %v1529 = vtanh.pop %v1401
    %v1530 = vtanh.pop %v1402
    %v1531 = vtanh.pop %v1403
    %v1532 = vtanh.pop %v1404
    %v1533 = vtanh.pop %v1405
    %v1534 = vtanh.pop %v1406
    %v1535 = vtanh.pop %v1407
    %v1536 = vtanh.pop %v1408
    %v1537 = vtanh.pop %v1409
    %v1538 = vtanh.pop %v1410
    %v1539 = vtanh.pop %v1411
    %v1540 = vtanh.pop %v1412
    %v1541 = vtanh.pop %v1413
    %v1542 = vtanh.pop %v1414
    %v1543 = vtanh.pop %v1415
    %v1544 = vtanh.pop %v1416
    %v1545 = vtanh.pop %v1417
    %v1546 = vtanh.pop %v1418
    %v1547 = vtanh.pop %v1419
    %v1548 = vtanh.pop %v1420
    %v1549 = vtanh.pop %v1421
    %v1550 = vtanh.pop %v1422
    %v1551 = vtanh.pop %v1423
    %v1552 = vtanh.pop %v1424
    %v1553 = vtanh.pop %v1425
    %v1554 = vtanh.pop %v1426
    %v1555 = vtanh.pop %v1427
    %v1556 = vtanh.pop %v1428
    %v1557 = vtanh.pop %v1429
    %v1558 = vtanh.pop %v1430
    %v1559 = vtanh.pop %v1431
    %v1560 = vtanh.pop %v1432
    %v1561 = vtanh.pop %v1433
    %v1562 = vtanh.pop %v1434
    %v1563 = vtanh.pop %v1435
    %v1564 = vtanh.pop %v1436
    %v1565 = vtanh.pop %v1437
    %v1566 = vtanh.pop %v1438
    %v1567 = vtanh.pop %v1439
    %v1568 = vtanh.pop %v1440
    %v1569 = vtanh.pop %v1441
    %v1570 = vtanh.pop %v1442
    %v1571 = vtanh.pop %v1443
    %v1572 = vtanh.pop %v1444
    %v1573 = vtanh.pop %v1445
    %v1574 = vtanh.pop %v1446
    %v1575 = vtanh.pop %v1447
    %v1576 = vtanh.pop %v1448
    %v1577 = vtanh.pop %v1449
    %v1578 = vtanh.pop %v1450
    %v1579 = vtanh.pop %v1451
    %v1580 = vtanh.pop %v1452
    %v1581 = vtanh.pop %v1453
    %v1582 = vtanh.pop %v1454
    %v1583 = vtanh.pop %v1455
    %v1584 = vtanh.pop %v1456
    %v1585 = vtanh.pop %v1457
    %v1586 = vtanh.pop %v1458
    %v1587 = vtanh.pop %v1459
    %v1588 = vtanh.pop %v1460
    %v1589 = vtanh.pop %v1461
    %v1590 = vtanh.pop %v1462
    %v1591 = vtanh.pop %v1463
    %v1592 = vtanh.pop %v1464
    %v1593 = vtanh.pop %v1465
    %v1594 = vtanh.pop %v1466
    %v1595 = vtanh.pop %v1467
    %v1596 = vtanh.pop %v1468
    %v1597 = vtanh.pop %v1469
    %v1598 = vtanh.pop %v1470
    %v1599 = vtanh.pop %v1471
    %v1600 = vtanh.pop %v1472
    %v1601 = vtanh.pop %v1473
    %v1602 = vtanh.pop %v1474
    %v1603 = vtanh.pop %v1475
    %v1604 = vtanh.pop %v1476
    %v1605 = vtanh.pop %v1477
    %v1606 = vtanh.pop %v1478
    %v1607 = vtanh.pop %v1479
    %v1608 = vtanh.pop %v1480
    %v1609 = vtanh.pop %v1481
    %v1610 = vtanh.pop %v1482
    %v1611 = vtanh.pop %v1483
    %v1612 = vtanh.pop %v1484
    %v1613 = vtanh.pop %v1485
    %v1614 = vtanh.pop %v1486
    %v1615 = vtanh.pop %v1487
    %v1616 = vtanh.pop %v1488
    %v1617 = vtanh.pop %v1489
    %v1618 = vtanh.pop %v1490
    %v1619 = vtanh.pop %v1491
    %v1620 = vtanh.pop %v1492
    %v1621 = vtanh.pop %v1493
    %v1622 = vtanh.pop %v1494
    %v1623 = vtanh.pop %v1495
    %v1624 = vtanh.pop %v1496
    %v1625 = vtanh.pop %v1497
    %v1626 = vtanh.pop %v1498
    %v1627 = vtanh.pop %v1499
    %v1628 = vtanh.pop %v1500
    %v1629 = vtanh.pop %v1501
    %v1630 = vtanh.pop %v1502
    %v1631 = vtanh.pop %v1503
    %v1632 = vtanh.pop %v1504
    %v1633 = vtanh.pop %v1505
    %v1634 = vtanh.pop %v1506
    %v1635 = vtanh.pop %v1507
    %v1636 = vtanh.pop %v1508
    %v1637 = vtanh.pop %v1509
    %v1638 = vtanh.pop %v1510
    %v1639 = vtanh.pop %v1511
    %v1640 = vtanh.pop %v1512
    %v1641 = vtanh.pop %v1513
    %v1642 = vtanh.pop %v1514
    %v1643 = vtanh.pop %v1515
    %v1644 = vtanh.pop %v1516
    %v1645 = vtanh.pop %v1517
    %v1646 = vtanh.pop %v1518
    %v1647 = vtanh.pop %v1519
    %v1648 = vtanh.pop %v1520
    %v1649 = vtanh.pop %v1521
    %v1650 = vtanh.pop %v1522
    %v1651 = vtanh.pop %v1523
    %v1652 = vtanh.pop %v1524
    %v1653 = vtanh.pop %v1525
    %v1654 = vtanh.pop %v1526
    %v1655 = vtanh.pop %v1527
    %v1656 = vadd.f32 %v1528, 1.0
    %v1657 = vadd.f32 %v1529, 1.0
    %v1658 = vadd.f32 %v1530, 1.0
    %v1659 = vadd.f32 %v1531, 1.0
    %v1660 = vadd.f32 %v1532, 1.0
    %v1661 = vadd.f32 %v1533, 1.0
    %v1662 = vadd.f32 %v1534, 1.0
    %v1663 = vadd.f32 %v1535, 1.0
    %v1664 = vadd.f32 %v1536, 1.0
    %v1665 = vadd.f32 %v1537, 1.0
    %v1666 = vadd.f32 %v1538, 1.0
    %v1667 = vadd.f32 %v1539, 1.0
    %v1668 = vadd.f32 %v1540, 1.0
    %v1669 = vadd.f32 %v1541, 1.0
    %v1670 = vadd.f32 %v1542, 1.0
    %v1671 = vadd.f32 %v1543, 1.0
    %v1672 = vadd.f32 %v1544, 1.0
    %v1673 = vadd.f32 %v1545, 1.0
    %v1674 = vadd.f32 %v1546, 1.0
    %v1675 = vadd.f32 %v1547, 1.0
    %v1676 = vadd.f32 %v1548, 1.0
    %v1677 = vadd.f32 %v1549, 1.0
    %v1678 = vadd.f32 %v1550, 1.0
    %v1679 = vadd.f32 %v1551, 1.0
    %v1680 = vadd.f32 %v1552, 1.0
    %v1681 = vadd.f32 %v1553, 1.0
    %v1682 = vadd.f32 %v1554, 1.0
    %v1683 = vadd.f32 %v1555, 1.0
    %v1684 = vadd.f32 %v1556, 1.0
    %v1685 = vadd.f32 %v1557, 1.0
    %v1686 = vadd.f32 %v1558, 1.0
    %v1687 = vadd.f32 %v1559, 1.0
    %v1688 = vadd.f32 %v1560, 1.0
    %v1689 = vadd.f32 %v1561, 1.0
    %v1690 = vadd.f32 %v1562, 1.0
    %v1691 = vadd.f32 %v1563, 1.0
    %v1692 = vadd.f32 %v1564, 1.0
    %v1693 = vadd.f32 %v1565, 1.0
    %v1694 = vadd.f32 %v1566, 1.0
    %v1695 = vadd.f32 %v1567, 1.0
    %v1696 = vadd.f32 %v1568, 1.0
    %v1697 = vadd.f32 %v1569, 1.0
    %v1698 = vadd.f32 %v1570, 1.0
    %v1699 = vadd.f32 %v1571, 1.0
    %v1700 = vadd.f32 %v1572, 1.0
    %v1701 = vadd.f32 %v1573, 1.0
    %v1702 = vadd.f32 %v1574, 1.0
    %v1703 = vadd.f32 %v1575, 1.0
    %v1704 = vadd.f32 %v1576, 1.0
    %v1705 = vadd.f32 %v1577, 1.0
    %v1706 = vadd.f32 %v1578, 1.0
    %v1707 = vadd.f32 %v1579, 1.0
    %v1708 = vadd.f32 %v1580, 1.0
    %v1709 = vadd.f32 %v1581, 1.0
    %v1710 = vadd.f32 %v1582, 1.0
    %v1711 = vadd.f32 %v1583, 1.0
    %v1712 = vadd.f32 %v1584, 1.0
    %v1713 = vadd.f32 %v1585, 1.0
    %v1714 = vadd.f32 %v1586, 1.0
    %v1715 = vadd.f32 %v1587, 1.0
    %v1716 = vadd.f32 %v1588, 1.0
    %v1717 = vadd.f32 %v1589, 1.0
    %v1718 = vadd.f32 %v1590, 1.0
    %v1719 = vadd.f32 %v1591, 1.0
    %v1720 = vadd.f32 %v1592, 1.0
    %v1721 = vadd.f32 %v1593, 1.0
    %v1722 = vadd.f32 %v1594, 1.0
    %v1723 = vadd.f32 %v1595, 1.0
    %v1724 = vadd.f32 %v1596, 1.0
    %v1725 = vadd.f32 %v1597, 1.0
    %v1726 = vadd.f32 %v1598, 1.0
    %v1727 = vadd.f32 %v1599, 1.0
    %v1728 = vadd.f32 %v1600, 1.0
    %v1729 = vadd.f32 %v1601, 1.0
    %v1730 = vadd.f32 %v1602, 1.0
    %v1731 = vadd.f32 %v1603, 1.0
    %v1732 = vadd.f32 %v1604, 1.0
    %v1733 = vadd.f32 %v1605, 1.0
    %v1734 = vadd.f32 %v1606, 1.0
    %v1735 = vadd.f32 %v1607, 1.0
    %v1736 = vadd.f32 %v1608, 1.0
    %v1737 = vadd.f32 %v1609, 1.0
    %v1738 = vadd.f32 %v1610, 1.0
    %v1739 = vadd.f32 %v1611, 1.0
    %v1740 = vadd.f32 %v1612, 1.0
    %v1741 = vadd.f32 %v1613, 1.0
    %v1742 = vadd.f32 %v1614, 1.0
    %v1743 = vadd.f32 %v1615, 1.0
    %v1744 = vadd.f32 %v1616, 1.0
    %v1745 = vadd.f32 %v1617, 1.0
    %v1746 = vadd.f32 %v1618, 1.0
    %v1747 = vadd.f32 %v1619, 1.0
    %v1748 = vadd.f32 %v1620, 1.0
    %v1749 = vadd.f32 %v1621, 1.0
    %v1750 = vadd.f32 %v1622, 1.0
    %v1751 = vadd.f32 %v1623, 1.0
    %v1752 = vadd.f32 %v1624, 1.0
    %v1753 = vadd.f32 %v1625, 1.0
    %v1754 = vadd.f32 %v1626, 1.0
    %v1755 = vadd.f32 %v1627, 1.0
    %v1756 = vadd.f32 %v1628, 1.0
    %v1757 = vadd.f32 %v1629, 1.0
    %v1758 = vadd.f32 %v1630, 1.0
    %v1759 = vadd.f32 %v1631, 1.0
    %v1760 = vadd.f32 %v1632, 1.0
    %v1761 = vadd.f32 %v1633, 1.0
    %v1762 = vadd.f32 %v1634, 1.0
    %v1763 = vadd.f32 %v1635, 1.0
    %v1764 = vadd.f32 %v1636, 1.0
    %v1765 = vadd.f32 %v1637, 1.0
    %v1766 = vadd.f32 %v1638, 1.0
    %v1767 = vadd.f32 %v1639, 1.0
    %v1768 = vadd.f32 %v1640, 1.0
    %v1769 = vadd.f32 %v1641, 1.0
    %v1770 = vadd.f32 %v1642, 1.0
    %v1771 = vadd.f32 %v1643, 1.0
    %v1772 = vadd.f32 %v1644, 1.0
    %v1773 = vadd.f32 %v1645, 1.0
    %v1774 = vadd.f32 %v1646, 1.0
    %v1775 = vadd.f32 %v1647, 1.0
    %v1776 = vadd.f32 %v1648, 1.0
    %v1777 = vadd.f32 %v1649, 1.0
    %v1778 = vadd.f32 %v1650, 1.0
    %v1779 = vadd.f32 %v1651, 1.0
    %v1780 = vadd.f32 %v1652, 1.0
    %v1781 = vadd.f32 %v1653, 1.0
    %v1782 = vadd.f32 %v1654, 1.0
    %v1783 = vadd.f32 %v1655, 1.0
    %v1784 = vmul.f32 %v1656, 0.5
    %v1785 = vmul.f32 %v1657, 0.5
    %v1786 = vmul.f32 %v1658, 0.5
    %v1787 = vmul.f32 %v1659, 0.5
    %v1788 = vmul.f32 %v1660, 0.5
    %v1789 = vmul.f32 %v1661, 0.5
    %v1790 = vmul.f32 %v1662, 0.5
    %v1791 = vmul.f32 %v1663, 0.5
    %v1792 = vmul.f32 %v1664, 0.5
    %v1793 = vmul.f32 %v1665, 0.5
    %v1794 = vmul.f32 %v1666, 0.5
    %v1795 = vmul.f32 %v1667, 0.5
    %v1796 = vmul.f32 %v1668, 0.5
    %v1797 = vmul.f32 %v1669, 0.5
    %v1798 = vmul.f32 %v1670, 0.5
    %v1799 = vmul.f32 %v1671, 0.5
    %v1800 = vmul.f32 %v1672, 0.5
    %v1801 = vmul.f32 %v1673, 0.5
    %v1802 = vmul.f32 %v1674, 0.5
    %v1803 = vmul.f32 %v1675, 0.5
    %v1804 = vmul.f32 %v1676, 0.5
    %v1805 = vmul.f32 %v1677, 0.5
    %v1806 = vmul.f32 %v1678, 0.5
    %v1807 = vmul.f32 %v1679, 0.5
    %v1808 = vmul.f32 %v1680, 0.5
    %v1809 = vmul.f32 %v1681, 0.5
    %v1810 = vmul.f32 %v1682, 0.5
    %v1811 = vmul.f32 %v1683, 0.5
    %v1812 = vmul.f32 %v1684, 0.5
    %v1813 = vmul.f32 %v1685, 0.5
    %v1814 = vmul.f32 %v1686, 0.5
    %v1815 = vmul.f32 %v1687, 0.5
    %v1816 = vmul.f32 %v1688, 0.5
    %v1817 = vmul.f32 %v1689, 0.5
    %v1818 = vmul.f32 %v1690, 0.5
    %v1819 = vmul.f32 %v1691, 0.5
    %v1820 = vmul.f32 %v1692, 0.5
    %v1821 = vmul.f32 %v1693, 0.5
    %v1822 = vmul.f32 %v1694, 0.5
    %v1823 = vmul.f32 %v1695, 0.5
    %v1824 = vmul.f32 %v1696, 0.5
    %v1825 = vmul.f32 %v1697, 0.5
    %v1826 = vmul.f32 %v1698, 0.5
    %v1827 = vmul.f32 %v1699, 0.5
    %v1828 = vmul.f32 %v1700, 0.5
    %v1829 = vmul.f32 %v1701, 0.5
    %v1830 = vmul.f32 %v1702, 0.5
    %v1831 = vmul.f32 %v1703, 0.5
    %v1832 = vmul.f32 %v1704, 0.5
    %v1833 = vmul.f32 %v1705, 0.5
    %v1834 = vmul.f32 %v1706, 0.5
    %v1835 = vmul.f32 %v1707, 0.5
    %v1836 = vmul.f32 %v1708, 0.5
    %v1837 = vmul.f32 %v1709, 0.5
    %v1838 = vmul.f32 %v1710, 0.5
    %v1839 = vmul.f32 %v1711, 0.5
    %v1840 = vmul.f32 %v1712, 0.5
    %v1841 = vmul.f32 %v1713, 0.5
    %v1842 = vmul.f32 %v1714, 0.5
    %v1843 = vmul.f32 %v1715, 0.5
    %v1844 = vmul.f32 %v1716, 0.5
    %v1845 = vmul.f32 %v1717, 0.5
    %v1846 = vmul.f32 %v1718, 0.5
    %v1847 = vmul.f32 %v1719, 0.5
    %v1848 = vmul.f32 %v1720, 0.5
    %v1849 = vmul.f32 %v1721, 0.5
    %v1850 = vmul.f32 %v1722, 0.5
    %v1851 = vmul.f32 %v1723, 0.5
    %v1852 = vmul.f32 %v1724, 0.5
    %v1853 = vmul.f32 %v1725, 0.5
    %v1854 = vmul.f32 %v1726, 0.5
    %v1855 = vmul.f32 %v1727, 0.5
    %v1856 = vmul.f32 %v1728, 0.5
    %v1857 = vmul.f32 %v1729, 0.5
    %v1858 = vmul.f32 %v1730, 0.5
    %v1859 = vmul.f32 %v1731, 0.5
    %v1860 = vmul.f32 %v1732, 0.5
    %v1861 = vmul.f32 %v1733, 0.5
    %v1862 = vmul.f32 %v1734, 0.5
    %v1863 = vmul.f32 %v1735, 0.5
    %v1864 = vmul.f32 %v1736, 0.5
    %v1865 = vmul.f32 %v1737, 0.5
    %v1866 = vmul.f32 %v1738, 0.5
    %v1867 = vmul.f32 %v1739, 0.5
    %v1868 = vmul.f32 %v1740, 0.5
    %v1869 = vmul.f32 %v1741, 0.5
    %v1870 = vmul.f32 %v1742, 0.5
    %v1871 = vmul.f32 %v1743, 0.5
    %v1872 = vmul.f32 %v1744, 0.5
    %v1873 = vmul.f32 %v1745, 0.5
    %v1874 = vmul.f32 %v1746, 0.5
    %v1875 = vmul.f32 %v1747, 0.5
    %v1876 = vmul.f32 %v1748, 0.5
    %v1877 = vmul.f32 %v1749, 0.5
    %v1878 = vmul.f32 %v1750, 0.5
    %v1879 = vmul.f32 %v1751, 0.5
    %v1880 = vmul.f32 %v1752, 0.5
    %v1881 = vmul.f32 %v1753, 0.5
    %v1882 = vmul.f32 %v1754, 0.5
    %v1883 = vmul.f32 %v1755, 0.5
    %v1884 = vmul.f32 %v1756, 0.5
    %v1885 = vmul.f32 %v1757, 0.5
    %v1886 = vmul.f32 %v1758, 0.5
    %v1887 = vmul.f32 %v1759, 0.5
    %v1888 = vmul.f32 %v1760, 0.5
    %v1889 = vmul.f32 %v1761, 0.5
    %v1890 = vmul.f32 %v1762, 0.5
    %v1891 = vmul.f32 %v1763, 0.5
    %v1892 = vmul.f32 %v1764, 0.5
    %v1893 = vmul.f32 %v1765, 0.5
    %v1894 = vmul.f32 %v1766, 0.5
    %v1895 = vmul.f32 %v1767, 0.5
    %v1896 = vmul.f32 %v1768, 0.5
    %v1897 = vmul.f32 %v1769, 0.5
    %v1898 = vmul.f32 %v1770, 0.5
    %v1899 = vmul.f32 %v1771, 0.5
    %v1900 = vmul.f32 %v1772, 0.5
    %v1901 = vmul.f32 %v1773, 0.5
    %v1902 = vmul.f32 %v1774, 0.5
    %v1903 = vmul.f32 %v1775, 0.5
    %v1904 = vmul.f32 %v1776, 0.5
    %v1905 = vmul.f32 %v1777, 0.5
    %v1906 = vmul.f32 %v1778, 0.5
    %v1907 = vmul.f32 %v1779, 0.5
    %v1908 = vmul.f32 %v1780, 0.5
    %v1909 = vmul.f32 %v1781, 0.5
    %v1910 = vmul.f32 %v1782, 0.5
    %v1911 = vmul.f32 %v1783, 0.5
    %v1912 = vtanh.pop %v535
    %v1913 = vtanh.pop %v537
    %v1914 = vtanh.pop %v792
    %v1915 = vtanh.pop %v794
    %v1916 = vtanh.pop %v1049
    %v1917 = vtanh.pop %v1051
    %v1918 = vtanh.pop %v1306
    %v1919 = vtanh.pop %v1308
    %v1920 = vtanh.pop %v541
    %v1921 = vtanh.pop %v543
    %v1922 = vtanh.pop %v798
    %v1923 = vtanh.pop %v800
    %v1924 = vtanh.pop %v1055
    %v1925 = vtanh.pop %v1057
    %v1926 = vtanh.pop %v1312
    %v1927 = vtanh.pop %v1314
    %v1928 = vtanh.pop %v547
    %v1929 = vtanh.pop %v549
    %v1930 = vtanh.pop %v804
    %v1931 = vtanh.pop %v806
    %v1932 = vtanh.pop %v1061
    %v1933 = vtanh.pop %v1063
    %v1934 = vtanh.pop %v1318
    %v1935 = vtanh.pop %v1320
    %v1936 = vtanh.pop %v553
    %v1937 = vtanh.pop %v555
    %v1938 = vtanh.pop %v810
    %v1939 = vtanh.pop %v812
    %v1940 = vtanh.pop %v1067
    %v1941 = vtanh.pop %v1069
    %v1942 = vtanh.pop %v1324
    %v1943 = vtanh.pop %v1326
    %v1944 = vtanh.pop %v559
    %v1945 = vtanh.pop %v561
    %v1946 = vtanh.pop %v816
    %v1947 = vtanh.pop %v818
    %v1948 = vtanh.pop %v1073
    %v1949 = vtanh.pop %v1075
    %v1950 = vtanh.pop %v1330
    %v1951 = vtanh.pop %v1332
    %v1952 = vtanh.pop %v565
    %v1953 = vtanh.pop %v567
    %v1954 = vtanh.pop %v822
    %v1955 = vtanh.pop %v824
    %v1956 = vtanh.pop %v1079
    %v1957 = vtanh.pop %v1081
    %v1958 = vtanh.pop %v1336
    %v1959 = vtanh.pop %v1338
    %v1960 = vtanh.pop %v571
    %v1961 = vtanh.pop %v573
    %v1962 = vtanh.pop %v828
    %v1963 = vtanh.pop %v830
    %v1964 = vtanh.pop %v1085
    %v1965 = vtanh.pop %v1087
    %v1966 = vtanh.pop %v1342
    %v1967 = vtanh.pop %v1344
    %v1968 = vtanh.pop %v577
    %v1969 = vtanh.pop %v579
    %v1970 = vtanh.pop %v834
    %v1971 = vtanh.pop %v836
    %v1972 = vtanh.pop %v1091
    %v1973 = vtanh.pop %v1093
    %v1974 = vtanh.pop %v1348
    %v1975 = vtanh.pop %v1350
    %v1976 = vtanh.pop %v583
    %v1977 = vtanh.pop %v585
    %v1978 = vtanh.pop %v840
    %v1979 = vtanh.pop %v842
    %v1980 = vtanh.pop %v1097
    %v1981 = vtanh.pop %v1099
    %v1982 = vtanh.pop %v1354
    %v1983 = vtanh.pop %v1356
    %v1984 = vtanh.pop %v589
    %v1985 = vtanh.pop %v591
    %v1986 = vtanh.pop %v846
    %v1987 = vtanh.pop %v848
    %v1988 = vtanh.pop %v1103
    %v1989 = vtanh.pop %v1105
    %v1990 = vtanh.pop %v1360
    %v1991 = vtanh.pop %v1362
    %v1992 = vtanh.pop %v595
    %v1993 = vtanh.pop %v597
    %v1994 = vtanh.pop %v852
    %v1995 = vtanh.pop %v854
    %v1996 = vtanh.pop %v1109
    %v1997 = vtanh.pop %v1111
    %v1998 = vtanh.pop %v1366
    %v1999 = vtanh.pop %v1368
    %v2000 = vtanh.pop %v601
    %v2001 = vtanh.pop %v603
    %v2002 = vtanh.pop %v858
    %v2003 = vtanh.pop %v860
    %v2004 = vtanh.pop %v1115
    %v2005 = vtanh.pop %v1117
    %v2006 = vtanh.pop %v1372
    %v2007 = vtanh.pop %v1374
    %v2008 = vtanh.pop %v607
    %v2009 = vtanh.pop %v609
    %v2010 = vtanh.pop %v864
    %v2011 = vtanh.pop %v866
    %v2012 = vtanh.pop %v1121
    %v2013 = vtanh.pop %v1123
    %v2014 = vtanh.pop %v1378
    %v2015 = vtanh.pop %v1380
    %v2016 = vtanh.pop %v613
    %v2017 = vtanh.pop %v615
    %v2018 = vtanh.pop %v870
    %v2019 = vtanh.pop %v872
    %v2020 = vtanh.pop %v1127
    %v2021 = vtanh.pop %v1129
    %v2022 = vtanh.pop %v1384
    %v2023 = vtanh.pop %v1386
    %v2024 = vtanh.pop %v619
    %v2025 = vtanh.pop %v621
    %v2026 = vtanh.pop %v876
    %v2027 = vtanh.pop %v878
    %v2028 = vtanh.pop %v1133
    %v2029 = vtanh.pop %v1135
    %v2030 = vtanh.pop %v1390
    %v2031 = vtanh.pop %v1392
    %v2032 = vtanh.pop %v625
    %v2033 = vtanh.pop %v627
    %v2034 = vtanh.pop %v882
    %v2035 = vtanh.pop %v884
    %v2036 = vtanh.pop %v1139
    %v2037 = vtanh.pop %v1141
    %v2038 = vtanh.pop %v1396
    %v2039 = vtanh.pop %v1398
    %v2040 = vsub.f32 1.0, %v1784
    %v2041 = vsub.f32 1.0, %v1785
    %v2042 = vsub.f32 1.0, %v1786
    %v2043 = vsub.f32 1.0, %v1787
    %v2044 = vsub.f32 1.0, %v1788
    %v2045 = vsub.f32 1.0, %v1789
    %v2046 = vsub.f32 1.0, %v1790
    %v2047 = vsub.f32 1.0, %v1791
    %v2048 = vsub.f32 1.0, %v1792
    %v2049 = vsub.f32 1.0, %v1793
    %v2050 = vsub.f32 1.0, %v1794
    %v2051 = vsub.f32 1.0, %v1795
    %v2052 = vsub.f32 1.0, %v1796
    %v2053 = vsub.f32 1.0, %v1797
    %v2054 = vsub.f32 1.0, %v1798
    %v2055 = vsub.f32 1.0, %v1799
    %v2056 = vsub.f32 1.0, %v1800
    %v2057 = vsub.f32 1.0, %v1801
    %v2058 = vsub.f32 1.0, %v1802
    %v2059 = vsub.f32 1.0, %v1803
    %v2060 = vsub.f32 1.0, %v1804
    %v2061 = vsub.f32 1.0, %v1805
    %v2062 = vsub.f32 1.0, %v1806
    %v2063 = vsub.f32 1.0, %v1807
    %v2064 = vsub.f32 1.0, %v1808
    %v2065 = vsub.f32 1.0, %v1809
    %v2066 = vsub.f32 1.0, %v1810
    %v2067 = vsub.f32 1.0, %v1811
    %v2068 = vsub.f32 1.0, %v1812
    %v2069 = vsub.f32 1.0, %v1813
    %v2070 = vsub.f32 1.0, %v1814
    %v2071 = vsub.f32 1.0, %v1815
    %v2072 = vsub.f32 1.0, %v1816
    %v2073 = vsub.f32 1.0, %v1817
    %v2074 = vsub.f32 1.0, %v1818
    %v2075 = vsub.f32 1.0, %v1819
    %v2076 = vsub.f32 1.0, %v1820
    %v2077 = vsub.f32 1.0, %v1821
    %v2078 = vsub.f32 1.0, %v1822
    %v2079 = vsub.f32 1.0, %v1823
    %v2080 = vsub.f32 1.0, %v1824
    %v2081 = vsub.f32 1.0, %v1825
    %v2082 = vsub.f32 1.0, %v1826
    %v2083 = vsub.f32 1.0, %v1827
    %v2084 = vsub.f32 1.0, %v1828
    %v2085 = vsub.f32 1.0, %v1829
    %v2086 = vsub.f32 1.0, %v1830
    %v2087 = vsub.f32 1.0, %v1831
    %v2088 = vsub.f32 1.0, %v1832
    %v2089 = vsub.f32 1.0, %v1833
    %v2090 = vsub.f32 1.0, %v1834
    %v2091 = vsub.f32 1.0, %v1835
    %v2092 = vsub.f32 1.0, %v1836
    %v2093 = vsub.f32 1.0, %v1837
    %v2094 = vsub.f32 1.0, %v1838
    %v2095 = vsub.f32 1.0, %v1839
    %v2096 = vsub.f32 1.0, %v1840
    %v2097 = vsub.f32 1.0, %v1841
    %v2098 = vsub.f32 1.0, %v1842
    %v2099 = vsub.f32 1.0, %v1843
    %v2100 = vsub.f32 1.0, %v1844
    %v2101 = vsub.f32 1.0, %v1845
    %v2102 = vsub.f32 1.0, %v1846
    %v2103 = vsub.f32 1.0, %v1847
    %v2104 = vsub.f32 1.0, %v1848
    %v2105 = vsub.f32 1.0, %v1849
    %v2106 = vsub.f32 1.0, %v1850
    %v2107 = vsub.f32 1.0, %v1851
    %v2108 = vsub.f32 1.0, %v1852
    %v2109 = vsub.f32 1.0, %v1853
    %v2110 = vsub.f32 1.0, %v1854
    %v2111 = vsub.f32 1.0, %v1855
    %v2112 = vsub.f32 1.0, %v1856
    %v2113 = vsub.f32 1.0, %v1857
    %v2114 = vsub.f32 1.0, %v1858
    %v2115 = vsub.f32 1.0, %v1859
    %v2116 = vsub.f32 1.0, %v1860
    %v2117 = vsub.f32 1.0, %v1861
    %v2118 = vsub.f32 1.0, %v1862
    %v2119 = vsub.f32 1.0, %v1863
    %v2120 = vsub.f32 1.0, %v1864
    %v2121 = vsub.f32 1.0, %v1865
    %v2122 = vsub.f32 1.0, %v1866
    %v2123 = vsub.f32 1.0, %v1867
    %v2124 = vsub.f32 1.0, %v1868
    %v2125 = vsub.f32 1.0, %v1869
    %v2126 = vsub.f32 1.0, %v1870
    %v2127 = vsub.f32 1.0, %v1871
    %v2128 = vsub.f32 1.0, %v1872
    %v2129 = vsub.f32 1.0, %v1873
    %v2130 = vsub.f32 1.0, %v1874
    %v2131 = vsub.f32 1.0, %v1875
    %v2132 = vsub.f32 1.0, %v1876
    %v2133 = vsub.f32 1.0, %v1877
    %v2134 = vsub.f32 1.0, %v1878
    %v2135 = vsub.f32 1.0, %v1879
    %v2136 = vsub.f32 1.0, %v1880
    %v2137 = vsub.f32 1.0, %v1881
    %v2138 = vsub.f32 1.0, %v1882
    %v2139 = vsub.f32 1.0, %v1883
    %v2140 = vsub.f32 1.0, %v1884
    %v2141 = vsub.f32 1.0, %v1885
    %v2142 = vsub.f32 1.0, %v1886
    %v2143 = vsub.f32 1.0, %v1887
    %v2144 = vsub.f32 1.0, %v1888
    %v2145 = vsub.f32 1.0, %v1889
    %v2146 = vsub.f32 1.0, %v1890
    %v2147 = vsub.f32 1.0, %v1891
    %v2148 = vsub.f32 1.0, %v1892
    %v2149 = vsub.f32 1.0, %v1893
    %v2150 = vsub.f32 1.0, %v1894
    %v2151 = vsub.f32 1.0, %v1895
    %v2152 = vsub.f32 1.0, %v1896
    %v2153 = vsub.f32 1.0, %v1897
    %v2154 = vsub.f32 1.0, %v1898
    %v2155 = vsub.f32 1.0, %v1899
    %v2156 = vsub.f32 1.0, %v1900
    %v2157 = vsub.f32 1.0, %v1901
    %v2158 = vsub.f32 1.0, %v1902
    %v2159 = vsub.f32 1.0, %v1903
    %v2160 = vsub.f32 1.0, %v1904
    %v2161 = vsub.f32 1.0, %v1905
    %v2162 = vsub.f32 1.0, %v1906
    %v2163 = vsub.f32 1.0, %v1907
    %v2164 = vsub.f32 1.0, %v1908
    %v2165 = vsub.f32 1.0, %v1909
    %v2166 = vsub.f32 1.0, %v1910
    %v2167 = vsub.f32 1.0, %v1911
    %v2168 = vmul.f32 %v2040, %v1912
    %v2169 = vmul.f32 %v2041, %v1913
    %v2170 = vmul.f32 %v2042, %v1914
    %v2171 = vmul.f32 %v2043, %v1915
    %v2172 = vmul.f32 %v2044, %v1916
    %v2173 = vmul.f32 %v2045, %v1917
    %v2174 = vmul.f32 %v2046, %v1918
    %v2175 = vmul.f32 %v2047, %v1919
    %v2176 = vmul.f32 %v2048, %v1920
    %v2177 = vmul.f32 %v2049, %v1921
    %v2178 = vmul.f32 %v2050, %v1922
    %v2179 = vmul.f32 %v2051, %v1923
    %v2180 = vmul.f32 %v2052, %v1924
    %v2181 = vmul.f32 %v2053, %v1925
    %v2182 = vmul.f32 %v2054, %v1926
    %v2183 = vmul.f32 %v2055, %v1927
    %v2184 = vmul.f32 %v2056, %v1928
    %v2185 = vmul.f32 %v2057, %v1929
    %v2186 = vmul.f32 %v2058, %v1930
    %v2187 = vmul.f32 %v2059, %v1931
    %v2188 = vmul.f32 %v2060, %v1932
    %v2189 = vmul.f32 %v2061, %v1933
    %v2190 = vmul.f32 %v2062, %v1934
    %v2191 = vmul.f32 %v2063, %v1935
    %v2192 = vmul.f32 %v2064, %v1936
    %v2193 = vmul.f32 %v2065, %v1937
    %v2194 = vmul.f32 %v2066, %v1938
    %v2195 = vmul.f32 %v2067, %v1939
    %v2196 = vmul.f32 %v2068, %v1940
    %v2197 = vmul.f32 %v2069, %v1941
    %v2198 = vmul.f32 %v2070, %v1942
    %v2199 = vmul.f32 %v2071, %v1943
    %v2200 = vmul.f32 %v2072, %v1944
    %v2201 = vmul.f32 %v2073, %v1945
    %v2202 = vmul.f32 %v2074, %v1946
    %v2203 = vmul.f32 %v2075, %v1947
    %v2204 = vmul.f32 %v2076, %v1948
    %v2205 = vmul.f32 %v2077, %v1949
    %v2206 = vmul.f32 %v2078, %v1950
    %v2207 = vmul.f32 %v2079, %v1951
    %v2208 = vmul.f32 %v2080, %v1952
    %v2209 = vmul.f32 %v2081, %v1953
    %v2210 = vmul.f32 %v2082, %v1954
    %v2211 = vmul.f32 %v2083, %v1955
    %v2212 = vmul.f32 %v2084, %v1956
    %v2213 = vmul.f32 %v2085, %v1957
    %v2214 = vmul.f32 %v2086, %v1958
    %v2215 = vmul.f32 %v2087, %v1959
    %v2216 = vmul.f32 %v2088, %v1960
    %v2217 = vmul.f32 %v2089, %v1961
    %v2218 = vmul.f32 %v2090, %v1962
    %v2219 = vmul.f32 %v2091, %v1963
    %v2220 = vmul.f32 %v2092, %v1964
    %v2221 = vmul.f32 %v2093, %v1965
    %v2222 = vmul.f32 %v2094, %v1966
    %v2223 = vmul.f32 %v2095, %v1967
    %v2224 = vmul.f32 %v2096, %v1968
    %v2225 = vmul.f32 %v2097, %v1969
    %v2226 = vmul.f32 %v2098, %v1970
    %v2227 = vmul.f32 %v2099, %v1971
    %v2228 = vmul.f32 %v2100, %v1972
    %v2229 = vmul.f32 %v2101, %v1973
    %v2230 = vmul.f32 %v2102, %v1974
    %v2231 = vmul.f32 %v2103, %v1975
    %v2232 = vmul.f32 %v2104, %v1976
    %v2233 = vmul.f32 %v2105, %v1977
    %v2234 = vmul.f32 %v2106, %v1978
    %v2235 = vmul.f32 %v2107, %v1979
    %v2236 = vmul.f32 %v2108, %v1980
    %v2237 = vmul.f32 %v2109, %v1981
    %v2238 = vmul.f32 %v2110, %v1982
    %v2239 = vmul.f32 %v2111, %v1983
    %v2240 = vmul.f32 %v2112, %v1984
    %v2241 = vmul.f32 %v2113, %v1985
    %v2242 = vmul.f32 %v2114, %v1986
    %v2243 = vmul.f32 %v2115, %v1987
    %v2244 = vmul.f32 %v2116, %v1988
    %v2245 = vmul.f32 %v2117, %v1989
    %v2246 = vmul.f32 %v2118, %v1990
    %v2247 = vmul.f32 %v2119, %v1991
    %v2248 = vmul.f32 %v2120, %v1992
    %v2249 = vmul.f32 %v2121, %v1993
    %v2250 = vmul.f32 %v2122, %v1994
    %v2251 = vmul.f32 %v2123, %v1995
    %v2252 = vmul.f32 %v2124, %v1996
    %v2253 = vmul.f32 %v2125, %v1997
    %v2254 = vmul.f32 %v2126, %v1998
    %v2255 = vmul.f32 %v2127, %v1999
    %v2256 = vmul.f32 %v2128, %v2000
    %v2257 = vmul.f32 %v2129, %v2001
    %v2258 = vmul.f32 %v2130, %v2002
    %v2259 = vmul.f32 %v2131, %v2003
    %v2260 = vmul.f32 %v2132, %v2004
    %v2261 = vmul.f32 %v2133, %v2005
    %v2262 = vmul.f32 %v2134, %v2006
    %v2263 = vmul.f32 %v2135, %v2007
    %v2264 = vmul.f32 %v2136, %v2008
    %v2265 = vmul.f32 %v2137, %v2009
    %v2266 = vmul.f32 %v2138, %v2010
    %v2267 = vmul.f32 %v2139, %v2011
    %v2268 = vmul.f32 %v2140, %v2012
    %v2269 = vmul.f32 %v2141, %v2013
    %v2270 = vmul.f32 %v2142, %v2014
    %v2271 = vmul.f32 %v2143, %v2015
    %v2272 = vmul.f32 %v2144, %v2016
    %v2273 = vmul.f32 %v2145, %v2017
    %v2274 = vmul.f32 %v2146, %v2018
    %v2275 = vmul.f32 %v2147, %v2019
    %v2276 = vmul.f32 %v2148, %v2020
    %v2277 = vmul.f32 %v2149, %v2021
    %v2278 = vmul.f32 %v2150, %v2022
    %v2279 = vmul.f32 %v2151, %v2023
    %v2280 = vmul.f32 %v2152, %v2024
    %v2281 = vmul.f32 %v2153, %v2025
    %v2282 = vmul.f32 %v2154, %v2026
    %v2283 = vmul.f32 %v2155, %v2027
    %v2284 = vmul.f32 %v2156, %v2028
    %v2285 = vmul.f32 %v2157, %v2029
    %v2286 = vmul.f32 %v2158, %v2030
    %v2287 = vmul.f32 %v2159, %v2031
    %v2288 = vmul.f32 %v2160, %v2032
    %v2289 = vmul.f32 %v2161, %v2033
    %v2290 = vmul.f32 %v2162, %v2034
    %v2291 = vmul.f32 %v2163, %v2035
    %v2292 = vmul.f32 %v2164, %v2036
    %v2293 = vmul.f32 %v2165, %v2037
    %v2294 = vmul.f32 %v2166, %v2038
    %v2295 = vmul.f32 %v2167, %v2039
    %v2296 = vmax.f32 %v2168, 0.0
    %v2297 = vmax.f32 %v2169, 0.0
    %v2298 = vmax.f32 %v2170, 0.0
    %v2299 = vmax.f32 %v2171, 0.0
    %v2300 = vmax.f32 %v2172, 0.0
    %v2301 = vmax.f32 %v2173, 0.0
    %v2302 = vmax.f32 %v2174, 0.0
    %v2303 = vmax.f32 %v2175, 0.0
    %v2304 = vmax.f32 %v2176, 0.0
    %v2305 = vmax.f32 %v2177, 0.0
    %v2306 = vmax.f32 %v2178, 0.0
    %v2307 = vmax.f32 %v2179, 0.0
    %v2308 = vmax.f32 %v2180, 0.0
    %v2309 = vmax.f32 %v2181, 0.0
    %v2310 = vmax.f32 %v2182, 0.0
    %v2311 = vmax.f32 %v2183, 0.0
    %v2312 = vmax.f32 %v2184, 0.0
    %v2313 = vmax.f32 %v2185, 0.0
    %v2314 = vmax.f32 %v2186, 0.0
    %v2315 = vmax.f32 %v2187, 0.0
    %v2316 = vmax.f32 %v2188, 0.0
    %v2317 = vmax.f32 %v2189, 0.0
    %v2318 = vmax.f32 %v2190, 0.0
    %v2319 = vmax.f32 %v2191, 0.0
    %v2320 = vmax.f32 %v2192, 0.0
    %v2321 = vmax.f32 %v2193, 0.0
    %v2322 = vmax.f32 %v2194, 0.0
    %v2323 = vmax.f32 %v2195, 0.0
    %v2324 = vmax.f32 %v2196, 0.0
    %v2325 = vmax.f32 %v2197, 0.0
    %v2326 = vmax.f32 %v2198, 0.0
    %v2327 = vmax.f32 %v2199, 0.0
    %v2328 = vmax.f32 %v2200, 0.0
    %v2329 = vmax.f32 %v2201, 0.0
    %v2330 = vmax.f32 %v2202, 0.0
    %v2331 = vmax.f32 %v2203, 0.0
    %v2332 = vmax.f32 %v2204, 0.0
    %v2333 = vmax.f32 %v2205, 0.0
    %v2334 = vmax.f32 %v2206, 0.0
    %v2335 = vmax.f32 %v2207, 0.0
    %v2336 = vmax.f32 %v2208, 0.0
    %v2337 = vmax.f32 %v2209, 0.0
    %v2338 = vmax.f32 %v2210, 0.0
    %v2339 = vmax.f32 %v2211, 0.0
    %v2340 = vmax.f32 %v2212, 0.0
    %v2341 = vmax.f32 %v2213, 0.0
    %v2342 = vmax.f32 %v2214, 0.0
    %v2343 = vmax.f32 %v2215, 0.0
    %v2344 = vmax.f32 %v2216, 0.0
    %v2345 = vmax.f32 %v2217, 0.0
    %v2346 = vmax.f32 %v2218, 0.0
    %v2347 = vmax.f32 %v2219, 0.0
    %v2348 = vmax.f32 %v2220, 0.0
    %v2349 = vmax.f32 %v2221, 0.0
    %v2350 = vmax.f32 %v2222, 0.0
    %v2351 = vmax.f32 %v2223, 0.0
    %v2352 = vmax.f32 %v2224, 0.0
    %v2353 = vmax.f32 %v2225, 0.0
    %v2354 = vmax.f32 %v2226, 0.0
    %v2355 = vmax.f32 %v2227, 0.0
    %v2356 = vmax.f32 %v2228, 0.0
    %v2357 = vmax.f32 %v2229, 0.0
    %v2358 = vmax.f32 %v2230, 0.0
    %v2359 = vmax.f32 %v2231, 0.0
    %v2360 = vmax.f32 %v2232, 0.0
    %v2361 = vmax.f32 %v2233, 0.0
    %v2362 = vmax.f32 %v2234, 0.0
    %v2363 = vmax.f32 %v2235, 0.0
    %v2364 = vmax.f32 %v2236, 0.0
    %v2365 = vmax.f32 %v2237, 0.0
    %v2366 = vmax.f32 %v2238, 0.0
    %v2367 = vmax.f32 %v2239, 0.0
    %v2368 = vmax.f32 %v2240, 0.0
    %v2369 = vmax.f32 %v2241, 0.0
    %v2370 = vmax.f32 %v2242, 0.0
    %v2371 = vmax.f32 %v2243, 0.0
    %v2372 = vmax.f32 %v2244, 0.0
    %v2373 = vmax.f32 %v2245, 0.0
    %v2374 = vmax.f32 %v2246, 0.0
    %v2375 = vmax.f32 %v2247, 0.0
    %v2376 = vmax.f32 %v2248, 0.0
    %v2377 = vmax.f32 %v2249, 0.0
    %v2378 = vmax.f32 %v2250, 0.0
    %v2379 = vmax.f32 %v2251, 0.0
    %v2380 = vmax.f32 %v2252, 0.0
    %v2381 = vmax.f32 %v2253, 0.0
    %v2382 = vmax.f32 %v2254, 0.0
    %v2383 = vmax.f32 %v2255, 0.0
    %v2384 = vmax.f32 %v2256, 0.0
    %v2385 = vmax.f32 %v2257, 0.0
    %v2386 = vmax.f32 %v2258, 0.0
    %v2387 = vmax.f32 %v2259, 0.0
    %v2388 = vmax.f32 %v2260, 0.0
    %v2389 = vmax.f32 %v2261, 0.0
    %v2390 = vmax.f32 %v2262, 0.0
    %v2391 = vmax.f32 %v2263, 0.0
    %v2392 = vmax.f32 %v2264, 0.0
    %v2393 = vmax.f32 %v2265, 0.0
    %v2394 = vmax.f32 %v2266, 0.0
    %v2395 = vmax.f32 %v2267, 0.0
    %v2396 = vmax.f32 %v2268, 0.0
    %v2397 = vmax.f32 %v2269, 0.0
    %v2398 = vmax.f32 %v2270, 0.0
    %v2399 = vmax.f32 %v2271, 0.0
    %v2400 = vmax.f32 %v2272, 0.0
    %v2401 = vmax.f32 %v2273, 0.0
    %v2402 = vmax.f32 %v2274, 0.0
    %v2403 = vmax.f32 %v2275, 0.0
    %v2404 = vmax.f32 %v2276, 0.0
    %v2405 = vmax.f32 %v2277, 0.0
    %v2406 = vmax.f32 %v2278, 0.0
    %v2407 = vmax.f32 %v2279, 0.0
    %v2408 = vmax.f32 %v2280, 0.0
    %v2409 = vmax.f32 %v2281, 0.0
    %v2410 = vmax.f32 %v2282, 0.0
    %v2411 = vmax.f32 %v2283, 0.0
    %v2412 = vmax.f32 %v2284, 0.0
    %v2413 = vmax.f32 %v2285, 0.0
    %v2414 = vmax.f32 %v2286, 0.0
    %v2415 = vmax.f32 %v2287, 0.0
    %v2416 = vmax.f32 %v2288, 0.0
    %v2417 = vmax.f32 %v2289, 0.0
    %v2418 = vmax.f32 %v2290, 0.0
    %v2419 = vmax.f32 %v2291, 0.0
    %v2420 = vmax.f32 %v2292, 0.0
    %v2421 = vmax.f32 %v2293, 0.0
    %v2422 = vmax.f32 %v2294, 0.0
    %v2423 = vmax.f32 %v2295, 0.0
    %v2424 = vld [vmem:[%s3] sm:$0x1]
    %s2425 = sld [smem:[#allocation2]]
    %v2426 = vstv %s2425
    %2427 = vmatprep.subr.mxu0 %v2297
    %2428 = vmatpush1.msra.mxu0 %v2296
    %2429 = vmatprep.subr.mxu0 %v2305
    %2430 = vmatpush1.msra.mxu0 %v2304
    %2431 = vmatprep.subr.mxu0 %v2313
    %2432 = vmatpush1.msra.mxu0 %v2312
    %2433 = vmatprep.subr.mxu0 %v2321
    %2434 = vmatpush1.msra.mxu0 %v2320
    %2435 = vmatprep.subr.mxu0 %v2329
    %2436 = vmatpush1.msra.mxu0 %v2328
    %2437 = vmatprep.subr.mxu0 %v2337
    %2438 = vmatpush1.msra.mxu0 %v2336
    %2439 = vmatprep.subr.mxu0 %v2345
    %2440 = vmatpush1.msra.mxu0 %v2344
    %2441 = vmatprep.subr.mxu0 %v2353
    %2442 = vmatpush1.msra.mxu0 %v2352
    %2443 = vmatprep.subr.mxu0 %v2361
    %2444 = vmatpush1.msra.mxu0 %v2360
    %2445 = vmatprep.subr.mxu0 %v2369
    %2446 = vmatpush1.msra.mxu0 %v2368
    %2447 = vmatprep.subr.mxu0 %v2377
    %2448 = vmatpush1.msra.mxu0 %v2376
    %2449 = vmatprep.subr.mxu0 %v2385
    %2450 = vmatpush1.msra.mxu0 %v2384
    %2451 = vmatprep.subr.mxu0 %v2393
    %2452 = vmatpush1.msra.mxu0 %v2392
    %2453 = vmatprep.subr.mxu0 %v2401
    %2454 = vmatpush1.msra.mxu0 %v2400
    %2455 = vmatprep.subr.mxu0 %v2409
    %2456 = vmatpush1.msra.mxu0 %v2408
    %2457 = vmatprep.subr.mxu0 %v2417
    %2458 = vmatpush1.msra.mxu0 %v2416
    %2459 = vmatprep.subr.mxu0 0.0
    %2460 = vmatpush1.msra.mxu0 0.0
    %2461 = vmatprep.subr.mxu0 0.0
    %2462 = vmatpush1.msra.mxu0 0.0
    %2463 = vmatprep.subr.mxu0 0.0
    %2464 = vmatpush1.msra.mxu0 0.0
    %2465 = vmatprep.subr.mxu0 0.0
    %2466 = vmatpush1.msra.mxu0 0.0
    %2467 = vmatprep.subr.mxu0 0.0
    %2468 = vmatpush1.msra.mxu0 0.0
    %2469 = vmatprep.subr.mxu0 0.0
    %2470 = vmatpush1.msra.mxu0 0.0
    %2471 = vmatprep.subr.mxu0 0.0
    %2472 = vmatpush1.msra.mxu0 0.0
    %2473 = vmatprep.subr.mxu0 0.0
    %2474 = vmatpush1.msra.mxu0 0.0
    %2475 = vmatprep.subr.mxu0 0.0
    %2476 = vmatpush1.msra.mxu0 0.0
    %2477 = vmatprep.subr.mxu0 0.0
    %2478 = vmatpush1.msra.mxu0 0.0
    %2479 = vmatprep.subr.mxu0 0.0
    %2480 = vmatpush1.msra.mxu0 0.0
    %2481 = vmatprep.subr.mxu0 0.0
    %2482 = vmatpush1.msra.mxu0 0.0
    %2483 = vmatprep.subr.mxu0 0.0
    %2484 = vmatpush1.msra.mxu0 0.0
    %2485 = vmatprep.subr.mxu0 0.0
    %2486 = vmatpush1.msra.mxu0 0.0
    %2487 = vmatprep.subr.mxu0 0.0
    %2488 = vmatpush1.msra.mxu0 0.0
    %2489 = vmatprep.subr.mxu0 0.0
    %2490 = vmatpush1.msra.mxu0 0.0
    %2491 = vmatprep.mubr.f32.mxu0 0.0
    %2492 = vmatmul.mubr.f32.gmra.mrb[0].mxu0 %v2424
    %v2493 = vpop.f32.mrb[0].mxu0
    %v2494 = vadd.f32 %v2426, %v2493
    %v2495 = vpop.f32.mrb[0].mxu0
    %v2496 = vadd.f32 %v2426, %v2495
    %2497 = vdwg.mxu0
    %2498 = vmatprep.subr.mxu0 %v2299
    %2499 = vmatpush1.msra.mxu0 %v2298
    %2500 = vmatprep.subr.mxu0 %v2307
    %2501 = vmatpush1.msra.mxu0 %v2306
    %2502 = vmatprep.subr.mxu0 %v2315
    %2503 = vmatpush1.msra.mxu0 %v2314
    %2504 = vmatprep.subr.mxu0 %v2323
    %2505 = vmatpush1.msra.mxu0 %v2322
    %2506 = vmatprep.subr.mxu0 %v2331
    %2507 = vmatpush1.msra.mxu0 %v2330
    %2508 = vmatprep.subr.mxu0 %v2339
    %2509 = vmatpush1.msra.mxu0 %v2338
    %2510 = vmatprep.subr.mxu0 %v2347
    %2511 = vmatpush1.msra.mxu0 %v2346
    %2512 = vmatprep.subr.mxu0 %v2355
    %2513 = vmatpush1.msra.mxu0 %v2354
    %2514 = vmatprep.subr.mxu0 %v2363
    %2515 = vmatpush1.msra.mxu0 %v2362
    %2516 = vmatprep.subr.mxu0 %v2371
    %2517 = vmatpush1.msra.mxu0 %v2370
    %2518 = vmatprep.subr.mxu0 %v2379
    %2519 = vmatpush1.msra.mxu0 %v2378
    %2520 = vmatprep.subr.mxu0 %v2387
    %2521 = vmatpush1.msra.mxu0 %v2386
    %2522 = vmatprep.subr.mxu0 %v2395
    %2523 = vmatpush1.msra.mxu0 %v2394
    %2524 = vmatprep.subr.mxu0 %v2403
    %2525 = vmatpush1.msra.mxu0 %v2402
    %2526 = vmatprep.subr.mxu0 %v2411
    %2527 = vmatpush1.msra.mxu0 %v2410
    %2528 = vmatprep.subr.mxu0 %v2419
    %2529 = vmatpush1.msra.mxu0 %v2418
    %2530 = vmatprep.subr.mxu0 0.0
    %2531 = vmatpush1.msra.mxu0 0.0
    %2532 = vmatprep.subr.mxu0 0.0
    %2533 = vmatpush1.msra.mxu0 0.0
    %2534 = vmatprep.subr.mxu0 0.0
    %2535 = vmatpush1.msra.mxu0 0.0
    %2536 = vmatprep.subr.mxu0 0.0
    %2537 = vmatpush1.msra.mxu0 0.0
    %2538 = vmatprep.subr.mxu0 0.0
    %2539 = vmatpush1.msra.mxu0 0.0
    %2540 = vmatprep.subr.mxu0 0.0
    %2541 = vmatpush1.msra.mxu0 0.0
    %2542 = vmatprep.subr.mxu0 0.0
    %2543 = vmatpush1.msra.mxu0 0.0
    %2544 = vmatprep.subr.mxu0 0.0
    %2545 = vmatpush1.msra.mxu0 0.0
    %2546 = vmatprep.subr.mxu0 0.0
    %2547 = vmatpush1.msra.mxu0 0.0
    %2548 = vmatprep.subr.mxu0 0.0
    %2549 = vmatpush1.msra.mxu0 0.0
    %2550 = vmatprep.subr.mxu0 0.0
    %2551 = vmatpush1.msra.mxu0 0.0
    %2552 = vmatprep.subr.mxu0 0.0
    %2553 = vmatpush1.msra.mxu0 0.0
    %2554 = vmatprep.subr.mxu0 0.0
    %2555 = vmatpush1.msra.mxu0 0.0
    %2556 = vmatprep.subr.mxu0 0.0
    %2557 = vmatpush1.msra.mxu0 0.0
    %2558 = vmatprep.subr.mxu0 0.0
    %2559 = vmatpush1.msra.mxu0 0.0
    %2560 = vmatprep.subr.mxu0 0.0
    %2561 = vmatpush1.msra.mxu0 0.0
    %2562 = vmatprep.mubr.f32.mxu0 0.0
    %2563 = vmatmul.mubr.f32.gmra.mrb[0].mxu0 %v2424
    %v2564 = vpop.f32.mrb[0].mxu0
    %v2565 = vadd.f32 %v2426, %v2564
    %v2566 = vpop.f32.mrb[0].mxu0
    %v2567 = vadd.f32 %v2426, %v2566
    %2568 = vdwg.mxu0
    %2569 = vmatprep.subr.mxu0 %v2301
    %2570 = vmatpush1.msra.mxu0 %v2300
    %2571 = vmatprep.subr.mxu0 %v2309
    %2572 = vmatpush1.msra.mxu0 %v2308
    %2573 = vmatprep.subr.mxu0 %v2317
    %2574 = vmatpush1.msra.mxu0 %v2316
    %2575 = vmatprep.subr.mxu0 %v2325
    %2576 = vmatpush1.msra.mxu0 %v2324
    %2577 = vmatprep.subr.mxu0 %v2333
    %2578 = vmatpush1.msra.mxu0 %v2332
    %2579 = vmatprep.subr.mxu0 %v2341
    %2580 = vmatpush1.msra.mxu0 %v2340
    %2581 = vmatprep.subr.mxu0 %v2349
    %2582 = vmatpush1.msra.mxu0 %v2348
    %2583 = vmatprep.subr.mxu0 %v2357
    %2584 = vmatpush1.msra.mxu0 %v2356
    %2585 = vmatprep.subr.mxu0 %v2365
    %2586 = vmatpush1.msra.mxu0 %v2364
    %2587 = vmatprep.subr.mxu0 %v2373
    %2588 = vmatpush1.msra.mxu0 %v2372
    %2589 = vmatprep.subr.mxu0 %v2381
    %2590 = vmatpush1.msra.mxu0 %v2380
    %2591 = vmatprep.subr.mxu0 %v2389
    %2592 = vmatpush1.msra.mxu0 %v2388
    %2593 = vmatprep.subr.mxu0 %v2397
    %2594 = vmatpush1.msra.mxu0 %v2396
    %2595 = vmatprep.subr.mxu0 %v2405
    %2596 = vmatpush1.msra.mxu0 %v2404
    %2597 = vmatprep.subr.mxu0 %v2413
    %2598 = vmatpush1.msra.mxu0 %v2412
    %2599 = vmatprep.subr.mxu0 %v2421
    %2600 = vmatpush1.msra.mxu0 %v2420
    %2601 = vmatprep.subr.mxu0 0.0
    %2602 = vmatpush1.msra.mxu0 0.0
    %2603 = vmatprep.subr.mxu0 0.0
    %2604 = vmatpush1.msra.mxu0 0.0
    %2605 = vmatprep.subr.mxu0 0.0
    %2606 = vmatpush1.msra.mxu0 0.0
    %2607 = vmatprep.subr.mxu0 0.0
    %2608 = vmatpush1.msra.mxu0 0.0
    %2609 = vmatprep.subr.mxu0 0.0
    %2610 = vmatpush1.msra.mxu0 0.0
    %2611 = vmatprep.subr.mxu0 0.0
    %2612 = vmatpush1.msra.mxu0 0.0
    %2613 = vmatprep.subr.mxu0 0.0
    %2614 = vmatpush1.msra.mxu0 0.0
    %2615 = vmatprep.subr.mxu0 0.0
    %2616 = vmatpush1.msra.mxu0 0.0
    %2617 = vmatprep.subr.mxu0 0.0
    %2618 = vmatpush1.msra.mxu0 0.0
    %2619 = vmatprep.subr.mxu0 0.0
    %2620 = vmatpush1.msra.mxu0 0.0
    %2621 = vmatprep.subr.mxu0 0.0
    %2622 = vmatpush1.msra.mxu0 0.0
    %2623 = vmatprep.subr.mxu0 0.0
    %2624 = vmatpush1.msra.mxu0 0.0
    %2625 = vmatprep.subr.mxu0 0.0
    %2626 = vmatpush1.msra.mxu0 0.0
    %2627 = vmatprep.subr.mxu0 0.0
    %2628 = vmatpush1.msra.mxu0 0.0
    %2629 = vmatprep.subr.mxu0 0.0
    %2630 = vmatpush1.msra.mxu0 0.0
    %2631 = vmatprep.subr.mxu0 0.0
    %2632 = vmatpush1.msra.mxu0 0.0
    %2633 = vmatprep.mubr.f32.mxu0 0.0
    %2634 = vmatmul.mubr.f32.gmra.mrb[0].mxu0 %v2424
    %v2635 = vpop.f32.mrb[0].mxu0
    %v2636 = vadd.f32 %v2426, %v2635
    %v2637 = vpop.f32.mrb[0].mxu0
    %v2638 = vadd.f32 %v2426, %v2637
    %2639 = vdwg.mxu0
    %2640 = vmatprep.subr.mxu0 %v2303
    %2641 = vmatpush1.msra.mxu0 %v2302
    %2642 = vmatprep.subr.mxu0 %v2311
    %2643 = vmatpush1.msra.mxu0 %v2310
    %2644 = vmatprep.subr.mxu0 %v2319
    %2645 = vmatpush1.msra.mxu0 %v2318
    %2646 = vmatprep.subr.mxu0 %v2327
    %2647 = vmatpush1.msra.mxu0 %v2326
    %2648 = vmatprep.subr.mxu0 %v2335
    %2649 = vmatpush1.msra.mxu0 %v2334
    %2650 = vmatprep.subr.mxu0 %v2343
    %2651 = vmatpush1.msra.mxu0 %v2342
    %2652 = vmatprep.subr.mxu0 %v2351
    %2653 = vmatpush1.msra.mxu0 %v2350
    %2654 = vmatprep.subr.mxu0 %v2359
    %2655 = vmatpush1.msra.mxu0 %v2358
    %2656 = vmatprep.subr.mxu0 %v2367
    %2657 = vmatpush1.msra.mxu0 %v2366
    %2658 = vmatprep.subr.mxu0 %v2375
    %2659 = vmatpush1.msra.mxu0 %v2374
    %2660 = vmatprep.subr.mxu0 %v2383
    %2661 = vmatpush1.msra.mxu0 %v2382
    %2662 = vmatprep.subr.mxu0 %v2391
    %2663 = vmatpush1.msra.mxu0 %v2390
    %2664 = vmatprep.subr.mxu0 %v2399
    %2665 = vmatpush1.msra.mxu0 %v2398
    %2666 = vmatprep.subr.mxu0 %v2407
    %2667 = vmatpush1.msra.mxu0 %v2406
    %2668 = vmatprep.subr.mxu0 %v2415
    %2669 = vmatpush1.msra.mxu0 %v2414
    %2670 = vmatprep.subr.mxu0 %v2423
    %2671 = vmatpush1.msra.mxu0 %v2422
    %2672 = vmatprep.subr.mxu0 0.0
    %2673 = vmatpush1.msra.mxu0 0.0
    %2674 = vmatprep.subr.mxu0 0.0
    %2675 = vmatpush1.msra.mxu0 0.0
    %2676 = vmatprep.subr.mxu0 0.0
    %2677 = vmatpush1.msra.mxu0 0.0
    %2678 = vmatprep.subr.mxu0 0.0
    %2679 = vmatpush1.msra.mxu0 0.0
    %2680 = vmatprep.subr.mxu0 0.0
    %2681 = vmatpush1.msra.mxu0 0.0
    %2682 = vmatprep.subr.mxu0 0.0
    %2683 = vmatpush1.msra.mxu0 0.0
    %2684 = vmatprep.subr.mxu0 0.0
    %2685 = vmatpush1.msra.mxu0 0.0
    %2686 = vmatprep.subr.mxu0 0.0
    %2687 = vmatpush1.msra.mxu0 0.0
    %2688 = vmatprep.subr.mxu0 0.0
    %2689 = vmatpush1.msra.mxu0 0.0
    %2690 = vmatprep.subr.mxu0 0.0
    %2691 = vmatpush1.msra.mxu0 0.0
    %2692 = vmatprep.subr.mxu0 0.0
    %2693 = vmatpush1.msra.mxu0 0.0
    %2694 = vmatprep.subr.mxu0 0.0
    %2695 = vmatpush1.msra.mxu0 0.0
    %2696 = vmatprep.subr.mxu0 0.0
    %2697 = vmatpush1.msra.mxu0 0.0
    %2698 = vmatprep.subr.mxu0 0.0
    %2699 = vmatpush1.msra.mxu0 0.0
    %2700 = vmatprep.subr.mxu0 0.0
    %2701 = vmatpush1.msra.mxu0 0.0
    %2702 = vmatprep.subr.mxu0 0.0
    %2703 = vmatpush1.msra.mxu0 0.0
    %2704 = vmatprep.mubr.f32.mxu0 0.0
    %2705 = vmatmul.mubr.f32.gmra.mrb[0].mxu0 %v2424
    %v2706 = vpop.f32.mrb[0].mxu0
    %v2707 = vadd.f32 %v2426, %v2706
    %v2708 = vpop.f32.mrb[0].mxu0
    %v2709 = vadd.f32 %v2426, %v2708
    %2710 = vdwg.mxu0
    %v2711 = vmul.f32 %v2494, 0.5
    %v2712 = vmul.f32 %v2496, 0.5
    %v2713 = vmul.f32 %v2565, 0.5
    %v2714 = vmul.f32 %v2567, 0.5
    %v2715 = vmul.f32 %v2636, 0.5
    %v2716 = vmul.f32 %v2638, 0.5
    %v2717 = vmul.f32 %v2707, 0.5
    %v2718 = vmul.f32 %v2709, 0.5
    %v2719 = vtanh.pop %v2711
    %v2720 = vtanh.pop %v2712
    %v2721 = vtanh.pop %v2713
    %v2722 = vtanh.pop %v2714
    %v2723 = vtanh.pop %v2715
    %v2724 = vtanh.pop %v2716
    %v2725 = vtanh.pop %v2717
    %v2726 = vtanh.pop %v2718
    %v2727 = vadd.f32 %v2719, 1.0
    %v2728 = vadd.f32 %v2720, 1.0
    %v2729 = vadd.f32 %v2721, 1.0
    %v2730 = vadd.f32 %v2722, 1.0
    %v2731 = vadd.f32 %v2723, 1.0
    %v2732 = vadd.f32 %v2724, 1.0
    %v2733 = vadd.f32 %v2725, 1.0
    %v2734 = vadd.f32 %v2726, 1.0
    %v2735 = vmul.f32 %v2727, 0.5
    %v2736 = vmul.f32 %v2728, 0.5
    %v2737 = vmul.f32 %v2729, 0.5
    %v2738 = vmul.f32 %v2730, 0.5
    %v2739 = vmul.f32 %v2731, 0.5
    %v2740 = vmul.f32 %v2732, 0.5
    %v2741 = vmul.f32 %v2733, 0.5
    %v2742 = vmul.f32 %v2734, 0.5
    %v2751 = vcombine.low %v2735, %v2736
    %v2752 = vcombine.low %v2737, %v2738
    %v2753 = vcombine.low %v2739, %v2740
    %v2754 = vcombine.low %v2741, %v2742
    %v2756 = vunpack.c.l.s4 1966171168
    %v2757 = vunpack.c.0.s8 %v2756
    %v2758 = vlaneseq
    %v2759 = vshrl.u32 %v2758, 7
    %v2760 = vsub.s32 %v2757, %v2759
    %v2761 = vrot.slane %v2751, %v2760
    %v2763 = vunpack.c.l.s4 1966171168
    %v2764 = vunpack.c.0.s8 %v2763
    %v2765 = vlaneseq
    %v2766 = vshrl.u32 %v2765, 7
    %v2767 = vsub.s32 %v2764, %v2766
    %v2768 = vrot.slane %v2752, %v2767
    %v2770 = vunpack.c.l.s4 1966171168
    %v2771 = vunpack.c.0.s8 %v2770
    %v2772 = vlaneseq
    %v2773 = vshrl.u32 %v2772, 7
    %v2774 = vsub.s32 %v2771, %v2773
    %v2775 = vrot.slane %v2753, %v2774
    %v2777 = vunpack.c.l.s4 1966171168
    %v2778 = vunpack.c.0.s8 %v2777
    %v2779 = vlaneseq
    %v2780 = vshrl.u32 %v2779, 7
    %v2781 = vsub.s32 %v2778, %v2780
    %v2782 = vrot.slane %v2754, %v2781
    %v2783 = vcombine.low %v2761, %v2768
    %v2784 = vcombine.low %v2775, %v2782
    %v2786 = vunpack.c.l.s4 1966171168
    %v2787 = vunpack.c.0.s8 %v2786
    %v2788 = vlaneseq
    %v2789 = vshrl.u32 %v2788, 7
    %v2790 = vsub.s32 %v2787, %v2789
    %v2791 = vrot.slane %v2783, %v2790
    %v2793 = vunpack.c.l.s4 1966171168
    %v2794 = vunpack.c.0.s8 %v2793
    %v2795 = vlaneseq
    %v2796 = vshrl.u32 %v2795, 7
    %v2797 = vsub.s32 %v2794, %v2796
    %v2798 = vrot.slane %v2784, %v2797
    %v2799 = vcombine.low %v2791, %v2798
    %2801 = vst [vmem:[#allocation3] sm:$0xff] %v2799
    // Predicated region
    $region22: #{tpu_custom_call.1} parent=1 // pred_check
      _
    $region23: #{tpu_custom_call.1} parent=1 // pred_check_branch
      %2803 = sbr.rel (0) target = $region25
    $region24: #{tpu_custom_call.1} parent=1 // pred_region
      %s2805 = ssub.s32 128, 128
      %2806 = vsyncadd [#allocation4], %s2805
      %s2808 = sshll.u32 [#allocation3], 4
      %s2809 = int_to_ptr.vmem [resolvable:$true] %s2808
      %2811 = dma.vmem_to_hbm [thread:$0]  %s2809, 128, %s5, [#allocation4]
    $region25: #{tpu_custom_call.1} parent=1 // pred_fallthru
      _
    // Predicated region
    $region26: #{tpu_custom_call.1} parent=1 // pred_check
      _
    $region27: #{tpu_custom_call.1} parent=1 // pred_check_branch
      %2813 = sbr.rel (0) target = $region29
    $region28: #{tpu_custom_call.1} parent=1 // pred_region
      %2814 = dma.done [#allocation4], 128
    $region29: #{tpu_custom_call.1} parent=1 // pred_fallthru
      _
    %2815 = vsyncpa [#allocation4], 1

</llo_original>
